<compile_context>
chip_gen: v7x
topology: tpu7x:2x2x1
jax: 0.10.0
libtpu: 0.0.40
codegen_flags: <defaults>
</compile_context>

<pallas_src>
import functools

import jax
import jax.numpy as jnp
from jax.experimental import pallas as pl
from jax.experimental.pallas import tpu as pltpu


# ----------------------------- Pallas kernel --------------------------------
def genlstm_kernel(nd_gates_ref, w_fused_ref, h_out_ref):
    """Serial LSTM recurrence only; emits the hidden state used at every output step.

    nd_gates_ref: (T, B, 4*Hp)  precomputed [noise, dt] gate contribution, biases folded
    w_fused_ref : (Hp, 4*Hp)    w_hh^T with output_net folded in
    h_out_ref   : (seq_len-1, B, Hp)  stacked hidden states (lane-dense, Hp % 128 == 0)
    """
    T, B, G = nd_gates_ref.shape
    n_h = h_out_ref.shape[0]          # seq_len - 1 hidden states emitted
    Hp = G // 4

    w_fused = w_fused_ref[...]        # (Hp, 4Hp) fused recurrent weight

    def apply_gates(gates, c):
        # gate order is [i, f, o, g] (reordered in prepare_params):
        # one sigmoid over the first three 128-lane groups, one tanh over the last.
        sig = jax.nn.sigmoid(gates[:, :3 * Hp])
        i_g = sig[:, 0 * Hp:1 * Hp]
        f_g = sig[:, 1 * Hp:2 * Hp]
        o_g = sig[:, 2 * Hp:3 * Hp]
        g_g = jnp.tanh(gates[:, 3 * Hp:])
        c_new = f_g * c + i_g * g_g
        h_new = o_g * jnp.tanh(c_new)
        return h_new, c_new

    # conditioning step: h = 0 and the seq_dim block of the input is zero, so the
    # gates are exactly nd_gates[0] (raw LSTM bias already folded in by the wrapper).
    c = jnp.zeros((B, Hp), jnp.float32)
    h, c = apply_gates(nd_gates_ref[0], c)
    h_out_ref[0] = h

    n_rem = T - 1  # remaining noise / dt steps after conditioning
    # static unroll: seq_len is a small compile-time constant here
    for i in range(n_h - 1):
        if i < n_rem:  # mirrors `if i < noise.shape[1]` in the PyTorch loop
            gates = (jnp.dot(h, w_fused, preferred_element_type=jnp.float32)
                     + nd_gates_ref[i + 1])
            h, c = apply_gates(gates, c)
        h_out_ref[i + 1] = h


# ------------------------------- wrapper -------------------------------------
@functools.partial(jax.jit, static_argnames=("seq_len",))
def genlstm_forward(prep, noise, t, seq_len):
    """noise: (B, T, noise_dim), t: (B, T+1, 1). Returns (B, seq_len, seq_dim)."""
    B, T, _ = noise.shape
    sd = prep["w_outT"].shape[1]
    Hp = prep["w_fused"].shape[0]

    dts = jnp.diff(t, axis=1)                              # (B, T, 1)
    nd_in = jnp.concatenate([noise, dts], axis=-1)         # (B, T, nd+1)
    # Hoisted: noise/dt contribution to the gates for ALL steps in one matmul,
    # emitted time-major (T, B, 4Hp) so the kernel just adds nd_gates[i].
    nd_gates = jnp.einsum("btf,fg->tbg", nd_in, prep["w_ndT"],
                          precision=jax.lax.Precision.HIGHEST)
    # Fold biases in here: removes a (B, 4Hp) VPU add from every serial kernel step.
    nd_gates = nd_gates.at[0].add(prep["b"])          # conditioning step: raw LSTM bias
    nd_gates = nd_gates.at[1:].add(prep["b_fused"])   # generation steps: fused bias

    vmem = pl.BlockSpec(memory_space=pltpu.MemorySpace.VMEM)
    h_states = pl.pallas_call(
        genlstm_kernel,
        out_shape=jax.ShapeDtypeStruct((seq_len - 1, B, Hp), jnp.float32),
        in_specs=[vmem, vmem],
        out_specs=vmem,
    )(nd_gates, prep["w_fused"])

    # output_net + cumsum off the serial chain: one batched matmul + scan in XLA.
    x = jnp.einsum("tbh,hd->tbd", h_states, prep["w_outT"],
                   precision=jax.lax.Precision.HIGHEST) + prep["b_out"]
    out_tm = jnp.concatenate([jnp.zeros((1, B, sd), jnp.float32), x], axis=0)
    out_tm = jnp.cumsum(out_tm, axis=0)                    # (seq_len, B, sd)
    return jnp.transpose(out_tm, (1, 0, 2))                # batch-first (B, seq_len, sd)


# ----------------------- deterministic parameter init ------------------------
def init_params(key, noise_dim, seq_dim, hidden_size):
    """Raw PyTorch-layout parameters (weight_ih_l0 / weight_hh_l0 / output_net)."""
    in_size = seq_dim + noise_dim + 1
    H = hidden_size
    stdv = 1.0 / float(H) ** 0.5
    ks = jax.random.split(key, 6)
    u = lambda k, shape: jax.random.uniform(k, shape, jnp.float32, -stdv, stdv)
    return dict(
        w_ih=u(ks[0], (4 * H, in_size)),
        w_hh=u(ks[1], (4 * H, H)),
        b_ih=u(ks[2], (4 * H,)),
        b_hh=u(ks[3], (4 * H,)),
        w_out=u(ks[4], (seq_dim, H)),
        b_out=u(ks[5], (seq_dim,)),
    )


def prepare_params(raw, noise_dim, seq_dim):
    """Transpose, lane-align (pad H -> multiple of 128), reorder gates to [i,f,o,g]
    and algebraically fold output_net into the recurrent weight.
    Numerics of the real lanes are unchanged."""
    hp = jax.lax.Precision.HIGHEST
    H = raw["w_hh"].shape[1]
    Hp = ((H + 127) // 128) * 128
    pad_h = Hp - H
    sd = seq_dim
    order = [0, 1, 3, 2]  # PyTorch gate order [i, f, g, o] -> kernel order [i, f, o, g]

    w_ihT = raw["w_ih"].T.reshape(-1, 4, H)[:, order, :]          # (in, 4, H)
    w_ihT = jnp.pad(w_ihT, ((0, 0), (0, 0), (0, pad_h))).reshape(-1, 4 * Hp)
    w_hhT = raw["w_hh"].T.reshape(H, 4, H)[:, order, :]
    w_hhT = jnp.pad(w_hhT, ((0, pad_h), (0, 0), (0, pad_h))).reshape(Hp, 4 * Hp)
    b = (raw["b_ih"] + raw["b_hh"]).reshape(4, H)[order, :]
    b = jnp.pad(b, ((0, 0), (0, pad_h))).reshape(1, 4 * Hp)
    w_outT = jnp.pad(raw["w_out"].T, ((0, pad_h), (0, 0)))        # (Hp, sd)
    b_out = raw["b_out"][None, :]                                 # (1, sd)

    # gates = [x, n, dt] @ w_ih^T + h @ w_hh^T + b   with   x = h @ w_out^T + b_out
    #       = h @ (w_hh^T + w_out^T @ w_ih^T[:sd]) + [n, dt] @ w_ih^T[sd:]
    #         + (b + b_out @ w_ih^T[:sd])
    w_fused = w_hhT + jnp.dot(w_outT, w_ihT[:sd, :], precision=hp)
    b_fused = b + jnp.dot(b_out, w_ihT[:sd, :], precision=hp)
    return dict(w_fused=w_fused, b=b, b_fused=b_fused,
                w_ndT=w_ihT[sd:, :], w_outT=w_outT, b_out=b_out)


# --------------------------- pure-JAX reference -------------------------------
def ref_forward(raw, noise, t, seq_len):
    """Faithful (unfused, unpadded, PyTorch gate order) reference of the forward."""
    B = noise.shape[0]
    H = raw["w_hh"].shape[1]
    sd = raw["w_out"].shape[0]
    hp = jax.lax.Precision.HIGHEST
    w_ihT, w_hhT = raw["w_ih"].T, raw["w_hh"].T
    b = (raw["b_ih"] + raw["b_hh"])[None, :]
    w_outT, b_out = raw["w_out"].T, raw["b_out"][None, :]

    def cell(x, h, c):
        g = (jnp.dot(x, w_ihT, precision=hp)
             + jnp.dot(h, w_hhT, precision=hp) + b)
        i_g = jax.nn.sigmoid(g[:, :H])
        f_g = jax.nn.sigmoid(g[:, H:2 * H])
        g_g = jnp.tanh(g[:, 2 * H:3 * H])
        o_g = jax.nn.sigmoid(g[:, 3 * H:])
        c_n = f_g * c + i_g * g_g
        return o_g * jnp.tanh(c_n), c_n

    dts = jnp.diff(t, axis=1)
    h = jnp.zeros((B, H), jnp.float32)
    c = jnp.zeros((B, H), jnp.float32)
    x0 = jnp.concatenate(
        [jnp.zeros((B, sd), jnp.float32), noise[:, 0], dts[:, 0]], axis=-1)
    h, c = cell(x0, h, c)
    output = h
    noise_r, dts_r = noise[:, 1:], dts[:, 1:]

    gen = []
    for i in range(seq_len - 1):
        x = jnp.dot(output, w_outT, precision=hp) + b_out
        gen.append(x)
        if i < noise_r.shape[1]:
            inp = jnp.concatenate([x, noise_r[:, i], dts_r[:, i]], axis=-1)
            h, c = cell(inp, h, c)
            output = h
    out_seq = jnp.stack([jnp.zeros((B, sd), jnp.float32)] + gen, axis=1)
    return jnp.cumsum(out_seq, axis=1)


# --------------------------------- main ---------------------------------------
if __name__ == "__main__":
    noise_dim, seq_dim, seq_len, hidden_size = 4, 3, 8, 32
    batch = 2

    key = jax.random.PRNGKey(0)
    kp, kn, kt = jax.random.split(key, 3)
    raw = init_params(kp, noise_dim, seq_dim, hidden_size)
    prep = prepare_params(raw, noise_dim, seq_dim)

    noise = jax.random.normal(kn, (batch, seq_len, noise_dim), jnp.float32)
    # monotone time grid -> positive dts (small deterministic jitter)
    base = jnp.linspace(0.0, 1.0, seq_len + 1, dtype=jnp.float32)[None, :, None]
    jitter = 0.01 * jax.random.uniform(kt, (batch, seq_len + 1, 1), jnp.float32)
    t = base + jitter  # (B, seq_len + 1, 1)

    out = genlstm_forward(prep, noise, t, seq_len)
    out = jax.block_until_ready(out)

    ref = ref_forward(raw, noise, t, seq_len)
    assert out.shape == (batch, seq_len, seq_dim), out.shape
    max_err = float(jnp.max(jnp.abs(out - ref)))
    assert jnp.allclose(out, ref, atol=2e-4, rtol=2e-4), f"max_err={max_err}"

    print("KERNEL_OK")
</pallas_src>

<mosaic_0001>
module attributes {stable_mosaic.version = 11 : i64} {
  func.func @genlstm_kernel(%arg0: memref<8x2x512xf32, #tpu.memory_space<vmem>>, %arg1: memref<128x512xf32, #tpu.memory_space<vmem>>, %arg2: memref<7x2x128xf32, #tpu.memory_space<vmem>>) attributes {dimension_semantics = [], scalar_prefetch = 0 : i64, scratch_operands = 0 : i64, tpu.core_type = #tpu.core_type<tc>} {
    %c0 = arith.constant 0 : index
    %c0_0 = arith.constant 0 : index
    %0 = vector.load %arg1[%c0, %c0_0] : memref<128x512xf32, #tpu.memory_space<vmem>>, vector<128x512xf32>
    %cst = arith.constant 0.000000e+00 : f32
    %1 = vector.broadcast %cst : f32 to vector<2x128xf32>
    %c0_1 = arith.constant 0 : index
    %c0_2 = arith.constant 0 : index
    %c0_3 = arith.constant 0 : index
    %2 = vector.load %arg0[%c0_1, %c0_2, %c0_3] : memref<8x2x512xf32, #tpu.memory_space<vmem>>, vector<1x2x512xf32>
    %3 = vector.shape_cast %2 : vector<1x2x512xf32> to vector<2x512xf32>
    %4 = vector.extract_strided_slice %3 {offsets = [0, 0], sizes = [2, 384], strides = [1, 1]} : vector<2x512xf32> to vector<2x384xf32>
    %5 = arith.negf %4 : vector<2x384xf32>
    %6 = math.exp %5 : vector<2x384xf32>
    %cst_4 = arith.constant 1.000000e+00 : f32
    %7 = vector.broadcast %cst_4 : f32 to vector<2x384xf32>
    %8 = arith.addf %7, %6 : vector<2x384xf32>
    %9 = arith.divf %7, %8 : vector<2x384xf32>
    %10 = vector.extract_strided_slice %9 {offsets = [0, 0], sizes = [2, 128], strides = [1, 1]} : vector<2x384xf32> to vector<2x128xf32>
    %11 = vector.extract_strided_slice %9 {offsets = [0, 128], sizes = [2, 128], strides = [1, 1]} : vector<2x384xf32> to vector<2x128xf32>
    %12 = vector.extract_strided_slice %9 {offsets = [0, 256], sizes = [2, 128], strides = [1, 1]} : vector<2x384xf32> to vector<2x128xf32>
    %13 = vector.extract_strided_slice %3 {offsets = [0, 384], sizes = [2, 128], strides = [1, 1]} : vector<2x512xf32> to vector<2x128xf32>
    %14 = math.tanh %13 : vector<2x128xf32>
    %15 = arith.mulf %11, %1 : vector<2x128xf32>
    %16 = arith.mulf %10, %14 : vector<2x128xf32>
    %17 = arith.addf %15, %16 : vector<2x128xf32>
    %18 = math.tanh %17 : vector<2x128xf32>
    %19 = arith.mulf %12, %18 : vector<2x128xf32>
    %c0_5 = arith.constant 0 : index
    %c0_6 = arith.constant 0 : index
    %c0_7 = arith.constant 0 : index
    %20 = vector.load %arg2[%c0_5, %c0_6, %c0_7] : memref<7x2x128xf32, #tpu.memory_space<vmem>>, vector<1x2x128xf32>
    %21 = vector.shape_cast %20 : vector<1x2x128xf32> to vector<2x128xf32>
    %22 = vector.shape_cast %19 : vector<2x128xf32> to vector<1x2x128xf32>
    tpu.vector_store %arg2[%c0_5, %c0_6, %c0_7], %22 {strides = array<i32>} : memref<7x2x128xf32, #tpu.memory_space<vmem>>, vector<1x2x128xf32>,
    %cst_8 = arith.constant dense<0.000000e+00> : vector<2x512xf32>
    %23 = tpu.matmul %19, %0, %cst_8 {dimension_numbers = #tpu.dot_dimension_numbers<[1], [0], [0], [1], [0, 0, 1, 1], [], []>} : vector<2x128xf32>, vector<128x512xf32>, vector<2x512xf32> -> vector<2x512xf32>
    %c1 = arith.constant 1 : index
    %c0_9 = arith.constant 0 : index
    %c0_10 = arith.constant 0 : index
    %24 = vector.load %arg0[%c1, %c0_9, %c0_10] : memref<8x2x512xf32, #tpu.memory_space<vmem>>, vector<1x2x512xf32>
    %25 = vector.shape_cast %24 : vector<1x2x512xf32> to vector<2x512xf32>
    %26 = arith.addf %23, %25 : vector<2x512xf32>
    %27 = vector.extract_strided_slice %26 {offsets = [0, 0], sizes = [2, 384], strides = [1, 1]} : vector<2x512xf32> to vector<2x384xf32>
    %28 = arith.negf %27 : vector<2x384xf32>
    %29 = math.exp %28 : vector<2x384xf32>
    %cst_11 = arith.constant 1.000000e+00 : f32
    %30 = vector.broadcast %cst_11 : f32 to vector<2x384xf32>
    %31 = arith.addf %30, %29 : vector<2x384xf32>
    %32 = arith.divf %30, %31 : vector<2x384xf32>
    %33 = vector.extract_strided_slice %32 {offsets = [0, 0], sizes = [2, 128], strides = [1, 1]} : vector<2x384xf32> to vector<2x128xf32>
    %34 = vector.extract_strided_slice %32 {offsets = [0, 128], sizes = [2, 128], strides = [1, 1]} : vector<2x384xf32> to vector<2x128xf32>
    %35 = vector.extract_strided_slice %32 {offsets = [0, 256], sizes = [2, 128], strides = [1, 1]} : vector<2x384xf32> to vector<2x128xf32>
    %36 = vector.extract_strided_slice %26 {offsets = [0, 384], sizes = [2, 128], strides = [1, 1]} : vector<2x512xf32> to vector<2x128xf32>
    %37 = math.tanh %36 : vector<2x128xf32>
    %38 = arith.mulf %34, %17 : vector<2x128xf32>
    %39 = arith.mulf %33, %37 : vector<2x128xf32>
    %40 = arith.addf %38, %39 : vector<2x128xf32>
    %41 = math.tanh %40 : vector<2x128xf32>
    %42 = arith.mulf %35, %41 : vector<2x128xf32>
    %c1_12 = arith.constant 1 : index
    %c0_13 = arith.constant 0 : index
    %c0_14 = arith.constant 0 : index
    %43 = vector.load %arg2[%c1_12, %c0_13, %c0_14] : memref<7x2x128xf32, #tpu.memory_space<vmem>>, vector<1x2x128xf32>
    %44 = vector.shape_cast %43 : vector<1x2x128xf32> to vector<2x128xf32>
    %45 = vector.shape_cast %42 : vector<2x128xf32> to vector<1x2x128xf32>
    tpu.vector_store %arg2[%c1_12, %c0_13, %c0_14], %45 {strides = array<i32>} : memref<7x2x128xf32, #tpu.memory_space<vmem>>, vector<1x2x128xf32>,
    %cst_15 = arith.constant dense<0.000000e+00> : vector<2x512xf32>
    %46 = tpu.matmul %42, %0, %cst_15 {dimension_numbers = #tpu.dot_dimension_numbers<[1], [0], [0], [1], [0, 0, 1, 1], [], []>} : vector<2x128xf32>, vector<128x512xf32>, vector<2x512xf32> -> vector<2x512xf32>
    %c2 = arith.constant 2 : index
    %c0_16 = arith.constant 0 : index
    %c0_17 = arith.constant 0 : index
    %47 = vector.load %arg0[%c2, %c0_16, %c0_17] : memref<8x2x512xf32, #tpu.memory_space<vmem>>, vector<1x2x512xf32>
    %48 = vector.shape_cast %47 : vector<1x2x512xf32> to vector<2x512xf32>
    %49 = arith.addf %46, %48 : vector<2x512xf32>
    %50 = vector.extract_strided_slice %49 {offsets = [0, 0], sizes = [2, 384], strides = [1, 1]} : vector<2x512xf32> to vector<2x384xf32>
    %51 = arith.negf %50 : vector<2x384xf32>
    %52 = math.exp %51 : vector<2x384xf32>
    %cst_18 = arith.constant 1.000000e+00 : f32
    %53 = vector.broadcast %cst_18 : f32 to vector<2x384xf32>
    %54 = arith.addf %53, %52 : vector<2x384xf32>
    %55 = arith.divf %53, %54 : vector<2x384xf32>
    %56 = vector.extract_strided_slice %55 {offsets = [0, 0], sizes = [2, 128], strides = [1, 1]} : vector<2x384xf32> to vector<2x128xf32>
    %57 = vector.extract_strided_slice %55 {offsets = [0, 128], sizes = [2, 128], strides = [1, 1]} : vector<2x384xf32> to vector<2x128xf32>
    %58 = vector.extract_strided_slice %55 {offsets = [0, 256], sizes = [2, 128], strides = [1, 1]} : vector<2x384xf32> to vector<2x128xf32>
    %59 = vector.extract_strided_slice %49 {offsets = [0, 384], sizes = [2, 128], strides = [1, 1]} : vector<2x512xf32> to vector<2x128xf32>
    %60 = math.tanh %59 : vector<2x128xf32>
    %61 = arith.mulf %57, %40 : vector<2x128xf32>
    %62 = arith.mulf %56, %60 : vector<2x128xf32>
    %63 = arith.addf %61, %62 : vector<2x128xf32>
    %64 = math.tanh %63 : vector<2x128xf32>
    %65 = arith.mulf %58, %64 : vector<2x128xf32>
    %c2_19 = arith.constant 2 : index
    %c0_20 = arith.constant 0 : index
    %c0_21 = arith.constant 0 : index
    %66 = vector.load %arg2[%c2_19, %c0_20, %c0_21] : memref<7x2x128xf32, #tpu.memory_space<vmem>>, vector<1x2x128xf32>
    %67 = vector.shape_cast %66 : vector<1x2x128xf32> to vector<2x128xf32>
    %68 = vector.shape_cast %65 : vector<2x128xf32> to vector<1x2x128xf32>
    tpu.vector_store %arg2[%c2_19, %c0_20, %c0_21], %68 {strides = array<i32>} : memref<7x2x128xf32, #tpu.memory_space<vmem>>, vector<1x2x128xf32>,
    %cst_22 = arith.constant dense<0.000000e+00> : vector<2x512xf32>
    %69 = tpu.matmul %65, %0, %cst_22 {dimension_numbers = #tpu.dot_dimension_numbers<[1], [0], [0], [1], [0, 0, 1, 1], [], []>} : vector<2x128xf32>, vector<128x512xf32>, vector<2x512xf32> -> vector<2x512xf32>
    %c3 = arith.constant 3 : index
    %c0_23 = arith.constant 0 : index
    %c0_24 = arith.constant 0 : index
    %70 = vector.load %arg0[%c3, %c0_23, %c0_24] : memref<8x2x512xf32, #tpu.memory_space<vmem>>, vector<1x2x512xf32>
    %71 = vector.shape_cast %70 : vector<1x2x512xf32> to vector<2x512xf32>
    %72 = arith.addf %69, %71 : vector<2x512xf32>
    %73 = vector.extract_strided_slice %72 {offsets = [0, 0], sizes = [2, 384], strides = [1, 1]} : vector<2x512xf32> to vector<2x384xf32>
    %74 = arith.negf %73 : vector<2x384xf32>
    %75 = math.exp %74 : vector<2x384xf32>
    %cst_25 = arith.constant 1.000000e+00 : f32
    %76 = vector.broadcast %cst_25 : f32 to vector<2x384xf32>
    %77 = arith.addf %76, %75 : vector<2x384xf32>
    %78 = arith.divf %76, %77 : vector<2x384xf32>
    %79 = vector.extract_strided_slice %78 {offsets = [0, 0], sizes = [2, 128], strides = [1, 1]} : vector<2x384xf32> to vector<2x128xf32>
    %80 = vector.extract_strided_slice %78 {offsets = [0, 128], sizes = [2, 128], strides = [1, 1]} : vector<2x384xf32> to vector<2x128xf32>
    %81 = vector.extract_strided_slice %78 {offsets = [0, 256], sizes = [2, 128], strides = [1, 1]} : vector<2x384xf32> to vector<2x128xf32>
    %82 = vector.extract_strided_slice %72 {offsets = [0, 384], sizes = [2, 128], strides = [1, 1]} : vector<2x512xf32> to vector<2x128xf32>
    %83 = math.tanh %82 : vector<2x128xf32>
    %84 = arith.mulf %80, %63 : vector<2x128xf32>
    %85 = arith.mulf %79, %83 : vector<2x128xf32>
    %86 = arith.addf %84, %85 : vector<2x128xf32>
    %87 = math.tanh %86 : vector<2x128xf32>
    %88 = arith.mulf %81, %87 : vector<2x128xf32>
    %c3_26 = arith.constant 3 : index
    %c0_27 = arith.constant 0 : index
    %c0_28 = arith.constant 0 : index
    %89 = vector.load %arg2[%c3_26, %c0_27, %c0_28] : memref<7x2x128xf32, #tpu.memory_space<vmem>>, vector<1x2x128xf32>
    %90 = vector.shape_cast %89 : vector<1x2x128xf32> to vector<2x128xf32>
    %91 = vector.shape_cast %88 : vector<2x128xf32> to vector<1x2x128xf32>
    tpu.vector_store %arg2[%c3_26, %c0_27, %c0_28], %91 {strides = array<i32>} : memref<7x2x128xf32, #tpu.memory_space<vmem>>, vector<1x2x128xf32>,
    %cst_29 = arith.constant dense<0.000000e+00> : vector<2x512xf32>
    %92 = tpu.matmul %88, %0, %cst_29 {dimension_numbers = #tpu.dot_dimension_numbers<[1], [0], [0], [1], [0, 0, 1, 1], [], []>} : vector<2x128xf32>, vector<128x512xf32>, vector<2x512xf32> -> vector<2x512xf32>
    %c4 = arith.constant 4 : index
    %c0_30 = arith.constant 0 : index
    %c0_31 = arith.constant 0 : index
    %93 = vector.load %arg0[%c4, %c0_30, %c0_31] : memref<8x2x512xf32, #tpu.memory_space<vmem>>, vector<1x2x512xf32>
    %94 = vector.shape_cast %93 : vector<1x2x512xf32> to vector<2x512xf32>
    %95 = arith.addf %92, %94 : vector<2x512xf32>
    %96 = vector.extract_strided_slice %95 {offsets = [0, 0], sizes = [2, 384], strides = [1, 1]} : vector<2x512xf32> to vector<2x384xf32>
    %97 = arith.negf %96 : vector<2x384xf32>
    %98 = math.exp %97 : vector<2x384xf32>
    %cst_32 = arith.constant 1.000000e+00 : f32
    %99 = vector.broadcast %cst_32 : f32 to vector<2x384xf32>
    %100 = arith.addf %99, %98 : vector<2x384xf32>
    %101 = arith.divf %99, %100 : vector<2x384xf32>
    %102 = vector.extract_strided_slice %101 {offsets = [0, 0], sizes = [2, 128], strides = [1, 1]} : vector<2x384xf32> to vector<2x128xf32>
    %103 = vector.extract_strided_slice %101 {offsets = [0, 128], sizes = [2, 128], strides = [1, 1]} : vector<2x384xf32> to vector<2x128xf32>
    %104 = vector.extract_strided_slice %101 {offsets = [0, 256], sizes = [2, 128], strides = [1, 1]} : vector<2x384xf32> to vector<2x128xf32>
    %105 = vector.extract_strided_slice %95 {offsets = [0, 384], sizes = [2, 128], strides = [1, 1]} : vector<2x512xf32> to vector<2x128xf32>
    %106 = math.tanh %105 : vector<2x128xf32>
    %107 = arith.mulf %103, %86 : vector<2x128xf32>
    %108 = arith.mulf %102, %106 : vector<2x128xf32>
    %109 = arith.addf %107, %108 : vector<2x128xf32>
    %110 = math.tanh %109 : vector<2x128xf32>
    %111 = arith.mulf %104, %110 : vector<2x128xf32>
    %c4_33 = arith.constant 4 : index
    %c0_34 = arith.constant 0 : index
    %c0_35 = arith.constant 0 : index
    %112 = vector.load %arg2[%c4_33, %c0_34, %c0_35] : memref<7x2x128xf32, #tpu.memory_space<vmem>>, vector<1x2x128xf32>
    %113 = vector.shape_cast %112 : vector<1x2x128xf32> to vector<2x128xf32>
    %114 = vector.shape_cast %111 : vector<2x128xf32> to vector<1x2x128xf32>
    tpu.vector_store %arg2[%c4_33, %c0_34, %c0_35], %114 {strides = array<i32>} : memref<7x2x128xf32, #tpu.memory_space<vmem>>, vector<1x2x128xf32>,
    %cst_36 = arith.constant dense<0.000000e+00> : vector<2x512xf32>
    %115 = tpu.matmul %111, %0, %cst_36 {dimension_numbers = #tpu.dot_dimension_numbers<[1], [0], [0], [1], [0, 0, 1, 1], [], []>} : vector<2x128xf32>, vector<128x512xf32>, vector<2x512xf32> -> vector<2x512xf32>
    %c5 = arith.constant 5 : index
    %c0_37 = arith.constant 0 : index
    %c0_38 = arith.constant 0 : index
    %116 = vector.load %arg0[%c5, %c0_37, %c0_38] : memref<8x2x512xf32, #tpu.memory_space<vmem>>, vector<1x2x512xf32>
    %117 = vector.shape_cast %116 : vector<1x2x512xf32> to vector<2x512xf32>
    %118 = arith.addf %115, %117 : vector<2x512xf32>
    %119 = vector.extract_strided_slice %118 {offsets = [0, 0], sizes = [2, 384], strides = [1, 1]} : vector<2x512xf32> to vector<2x384xf32>
    %120 = arith.negf %119 : vector<2x384xf32>
    %121 = math.exp %120 : vector<2x384xf32>
    %cst_39 = arith.constant 1.000000e+00 : f32
    %122 = vector.broadcast %cst_39 : f32 to vector<2x384xf32>
    %123 = arith.addf %122, %121 : vector<2x384xf32>
    %124 = arith.divf %122, %123 : vector<2x384xf32>
    %125 = vector.extract_strided_slice %124 {offsets = [0, 0], sizes = [2, 128], strides = [1, 1]} : vector<2x384xf32> to vector<2x128xf32>
    %126 = vector.extract_strided_slice %124 {offsets = [0, 128], sizes = [2, 128], strides = [1, 1]} : vector<2x384xf32> to vector<2x128xf32>
    %127 = vector.extract_strided_slice %124 {offsets = [0, 256], sizes = [2, 128], strides = [1, 1]} : vector<2x384xf32> to vector<2x128xf32>
    %128 = vector.extract_strided_slice %118 {offsets = [0, 384], sizes = [2, 128], strides = [1, 1]} : vector<2x512xf32> to vector<2x128xf32>
    %129 = math.tanh %128 : vector<2x128xf32>
    %130 = arith.mulf %126, %109 : vector<2x128xf32>
    %131 = arith.mulf %125, %129 : vector<2x128xf32>
    %132 = arith.addf %130, %131 : vector<2x128xf32>
    %133 = math.tanh %132 : vector<2x128xf32>
    %134 = arith.mulf %127, %133 : vector<2x128xf32>
    %c5_40 = arith.constant 5 : index
    %c0_41 = arith.constant 0 : index
    %c0_42 = arith.constant 0 : index
    %135 = vector.load %arg2[%c5_40, %c0_41, %c0_42] : memref<7x2x128xf32, #tpu.memory_space<vmem>>, vector<1x2x128xf32>
    %136 = vector.shape_cast %135 : vector<1x2x128xf32> to vector<2x128xf32>
    %137 = vector.shape_cast %134 : vector<2x128xf32> to vector<1x2x128xf32>
    tpu.vector_store %arg2[%c5_40, %c0_41, %c0_42], %137 {strides = array<i32>} : memref<7x2x128xf32, #tpu.memory_space<vmem>>, vector<1x2x128xf32>,
    %cst_43 = arith.constant dense<0.000000e+00> : vector<2x512xf32>
    %138 = tpu.matmul %134, %0, %cst_43 {dimension_numbers = #tpu.dot_dimension_numbers<[1], [0], [0], [1], [0, 0, 1, 1], [], []>} : vector<2x128xf32>, vector<128x512xf32>, vector<2x512xf32> -> vector<2x512xf32>
    %c6 = arith.constant 6 : index
    %c0_44 = arith.constant 0 : index
    %c0_45 = arith.constant 0 : index
    %139 = vector.load %arg0[%c6, %c0_44, %c0_45] : memref<8x2x512xf32, #tpu.memory_space<vmem>>, vector<1x2x512xf32>
    %140 = vector.shape_cast %139 : vector<1x2x512xf32> to vector<2x512xf32>
    %141 = arith.addf %138, %140 : vector<2x512xf32>
    %142 = vector.extract_strided_slice %141 {offsets = [0, 0], sizes = [2, 384], strides = [1, 1]} : vector<2x512xf32> to vector<2x384xf32>
    %143 = arith.negf %142 : vector<2x384xf32>
    %144 = math.exp %143 : vector<2x384xf32>
    %cst_46 = arith.constant 1.000000e+00 : f32
    %145 = vector.broadcast %cst_46 : f32 to vector<2x384xf32>
    %146 = arith.addf %145, %144 : vector<2x384xf32>
    %147 = arith.divf %145, %146 : vector<2x384xf32>
    %148 = vector.extract_strided_slice %147 {offsets = [0, 0], sizes = [2, 128], strides = [1, 1]} : vector<2x384xf32> to vector<2x128xf32>
    %149 = vector.extract_strided_slice %147 {offsets = [0, 128], sizes = [2, 128], strides = [1, 1]} : vector<2x384xf32> to vector<2x128xf32>
    %150 = vector.extract_strided_slice %147 {offsets = [0, 256], sizes = [2, 128], strides = [1, 1]} : vector<2x384xf32> to vector<2x128xf32>
    %151 = vector.extract_strided_slice %141 {offsets = [0, 384], sizes = [2, 128], strides = [1, 1]} : vector<2x512xf32> to vector<2x128xf32>
    %152 = math.tanh %151 : vector<2x128xf32>
    %153 = arith.mulf %149, %132 : vector<2x128xf32>
    %154 = arith.mulf %148, %152 : vector<2x128xf32>
    %155 = arith.addf %153, %154 : vector<2x128xf32>
    %156 = math.tanh %155 : vector<2x128xf32>
    %157 = arith.mulf %150, %156 : vector<2x128xf32>
    %c6_47 = arith.constant 6 : index
    %c0_48 = arith.constant 0 : index
    %c0_49 = arith.constant 0 : index
    %158 = vector.load %arg2[%c6_47, %c0_48, %c0_49] : memref<7x2x128xf32, #tpu.memory_space<vmem>>, vector<1x2x128xf32>
    %159 = vector.shape_cast %158 : vector<1x2x128xf32> to vector<2x128xf32>
    %160 = vector.shape_cast %157 : vector<2x128xf32> to vector<1x2x128xf32>
    tpu.vector_store %arg2[%c6_47, %c0_48, %c0_49], %160 {strides = array<i32>} : memref<7x2x128xf32, #tpu.memory_space<vmem>>, vector<1x2x128xf32>,
    return
  }
}

</mosaic_0001>

<llo_original>
// kernel: genlstm_forward.1
$region0: #{genlstm_forward.1}
  #allocation0 [shape = 'u32[]', space=smem, size = 0x4, offset = 0x4, fixed_abs, tag = 'smem constant byte address 0x4 - core index']
  #allocation1 [shape = 'u32[144,128]{1,0:T(1,128)}', space=vmem, size = 0x12000, scoped, tag = 'internal scratch']
  %s0 = inlined_call_operand.vmem [shape: f32[8,2,512], index: 0, kind: input, shape index: {}]
  %s1 = inlined_call_operand.vmem [shape: f32[128,512], index: 1, kind: input, shape index: {}]
  %s2 = inlined_call_operand.vmem [shape: f32[7,2,128], index: 2, kind: output, shape index: {}]
  %s3 = sld [smem:[#allocation0]]
  $region18: #{genlstm_forward.1} parent=0
    _
  %s5 = ssub.s32 1, %s3
  %s6 = scalar_select 0, %s5, %s3
  // Predicated region
  $region2: #{genlstm_forward.1} parent=0 // pred_check
    _
  $region3: #{genlstm_forward.1} parent=0 // pred_check_branch
    %8 = sbr.rel (0) target = $region5
  $region4: #{genlstm_forward.1} parent=0 // pred_region
    _
  $region5: #{genlstm_forward.1} parent=0 // pred_fallthru
    _
  // Predicated region
  $region6: #{genlstm_forward.1} parent=0 // pred_check
    _
  $region7: #{genlstm_forward.1} parent=0 // pred_check_branch
    %10 = sbr.rel (0) target = $region9
  $region8: #{genlstm_forward.1} parent=0 // pred_region
    _
  $region9: #{genlstm_forward.1} parent=0 // pred_fallthru
    _
  %v11 = vld [vmem:[%s1] sm:$0xff]
  %v12 = vld [vmem:[%s1 + $0x8] sm:$0xff]
  %v13 = vld [vmem:[%s1 + $0x10] sm:$0xff]
  %v14 = vld [vmem:[%s1 + $0x18] sm:$0xff]
  %v15 = vld [vmem:[%s1 + $0x20] sm:$0xff]
  %v16 = vld [vmem:[%s1 + $0x28] sm:$0xff]
  %v17 = vld [vmem:[%s1 + $0x30] sm:$0xff]
  %v18 = vld [vmem:[%s1 + $0x38] sm:$0xff]
  %v19 = vld [vmem:[%s1 + $0x40] sm:$0xff]
  %v20 = vld [vmem:[%s1 + $0x48] sm:$0xff]
  %v21 = vld [vmem:[%s1 + $0x50] sm:$0xff]
  %v22 = vld [vmem:[%s1 + $0x58] sm:$0xff]
  %v23 = vld [vmem:[%s1 + $0x60] sm:$0xff]
  %v24 = vld [vmem:[%s1 + $0x68] sm:$0xff]
  %v25 = vld [vmem:[%s1 + $0x70] sm:$0xff]
  %v26 = vld [vmem:[%s1 + $0x78] sm:$0xff]
  %v27 = vld [vmem:[%s1 + $0x80] sm:$0xff]
  %v28 = vld [vmem:[%s1 + $0x88] sm:$0xff]
  %v29 = vld [vmem:[%s1 + $0x90] sm:$0xff]
  %v30 = vld [vmem:[%s1 + $0x98] sm:$0xff]
  %v31 = vld [vmem:[%s1 + $0xa0] sm:$0xff]
  %v32 = vld [vmem:[%s1 + $0xa8] sm:$0xff]
  %v33 = vld [vmem:[%s1 + $0xb0] sm:$0xff]
  %v34 = vld [vmem:[%s1 + $0xb8] sm:$0xff]
  %v35 = vld [vmem:[%s1 + $0xc0] sm:$0xff]
  %v36 = vld [vmem:[%s1 + $0xc8] sm:$0xff]
  %v37 = vld [vmem:[%s1 + $0xd0] sm:$0xff]
  %v38 = vld [vmem:[%s1 + $0xd8] sm:$0xff]
  %v39 = vld [vmem:[%s1 + $0xe0] sm:$0xff]
  %v40 = vld [vmem:[%s1 + $0xe8] sm:$0xff]
  %v41 = vld [vmem:[%s1 + $0xf0] sm:$0xff]
  %v42 = vld [vmem:[%s1 + $0xf8] sm:$0xff]
  %v43 = vld [vmem:[%s1 + $0x100] sm:$0xff]
  %v44 = vld [vmem:[%s1 + $0x108] sm:$0xff]
  %v45 = vld [vmem:[%s1 + $0x110] sm:$0xff]
  %v46 = vld [vmem:[%s1 + $0x118] sm:$0xff]
  %v47 = vld [vmem:[%s1 + $0x120] sm:$0xff]
  %v48 = vld [vmem:[%s1 + $0x128] sm:$0xff]
  %v49 = vld [vmem:[%s1 + $0x130] sm:$0xff]
  %v50 = vld [vmem:[%s1 + $0x138] sm:$0xff]
  %v51 = vld [vmem:[%s1 + $0x140] sm:$0xff]
  %v52 = vld [vmem:[%s1 + $0x148] sm:$0xff]
  %v53 = vld [vmem:[%s1 + $0x150] sm:$0xff]
  %v54 = vld [vmem:[%s1 + $0x158] sm:$0xff]
  %v55 = vld [vmem:[%s1 + $0x160] sm:$0xff]
  %v56 = vld [vmem:[%s1 + $0x168] sm:$0xff]
  %v57 = vld [vmem:[%s1 + $0x170] sm:$0xff]
  %v58 = vld [vmem:[%s1 + $0x178] sm:$0xff]
  %v59 = vld [vmem:[%s1 + $0x180] sm:$0xff]
  %v60 = vld [vmem:[%s1 + $0x188] sm:$0xff]
  %v61 = vld [vmem:[%s1 + $0x190] sm:$0xff]
  %v62 = vld [vmem:[%s1 + $0x198] sm:$0xff]
  %v63 = vld [vmem:[%s1 + $0x1a0] sm:$0xff]
  %v64 = vld [vmem:[%s1 + $0x1a8] sm:$0xff]
  %v65 = vld [vmem:[%s1 + $0x1b0] sm:$0xff]
  %v66 = vld [vmem:[%s1 + $0x1b8] sm:$0xff]
  %v67 = vld [vmem:[%s1 + $0x1c0] sm:$0xff]
  %v68 = vld [vmem:[%s1 + $0x1c8] sm:$0xff]
  %v69 = vld [vmem:[%s1 + $0x1d0] sm:$0xff]
  %v70 = vld [vmem:[%s1 + $0x1d8] sm:$0xff]
  %v71 = vld [vmem:[%s1 + $0x1e0] sm:$0xff]
  %v72 = vld [vmem:[%s1 + $0x1e8] sm:$0xff]
  %v73 = vld [vmem:[%s1 + $0x1f0] sm:$0xff]
  %v74 = vld [vmem:[%s1 + $0x1f8] sm:$0xff]
  %v75 = vld [vmem:[%s0] sm:$0xff]
  %v76 = vxor.u32 %v75, 2147483648
  %v77 = vmul.f32 %v76, 1.442695
  %v78 = vpow.pop %v77
  %v79 = vadd.f32 %v78, 1.0
  %v80 = vrcp.pop %v79
  %v81 = vmul.f32 1.0, %v80
  %v83 = vrot.slane %v75, 6
  %v85 = vtanh.pop %v83
  %v87 = vrot.slane %v81, 2
  %v89 = vmul.f32 %v87, 0.0
  %v90 = vmul.f32 %v81, %v85
  %v91 = vadd.f32 %v89, %v90
  %v92 = vtanh.pop %v91
  %v93 = vrot.slane %v81, 4
  %v95 = vmul.f32 %v93, %v92
  %96 = vst [vmem:[%s2] sm:$0x3] %v95
  %s97 = scalar_lea.vmem %s0, 8
  %v98 = vld [vmem:[%s97] sm:$0xff]
  %v100 = vcombine.high %v98, %v98
  %v102 = vunpack.c.l.s4 1983009808
  %v103 = vunpack.c.0.s8 %v102
  %v104 = vlaneseq
  %v105 = vshrl.u32 %v104, 7
  %v106 = vsub.s32 %v103, %v105
  %v107 = vrot.slane %v98, %v106
  %v109 = vunpack.c.l.s4 1983009808
  %v110 = vunpack.c.0.s8 %v109
  %v111 = vlaneseq
  %v112 = vshrl.u32 %v111, 7
  %v113 = vsub.s32 %v110, %v112
  %v114 = vrot.slane %v100, %v113
  %v115 = vcombine.high %v107, %v107
  %v116 = vcombine.high %v114, %v114
  %121 = vmatprep.subr.mxu0 %v12
  %122 = vmatpush1.msra.mxu0 %v11
  %123 = vmatprep.subr.mxu0 %v16
  %124 = vmatpush1.msra.mxu0 %v15
  %125 = vmatprep.subr.mxu0 %v20
  %126 = vmatpush1.msra.mxu0 %v19
  %127 = vmatprep.subr.mxu0 %v24
  %128 = vmatpush1.msra.mxu0 %v23
  %129 = vmatprep.subr.mxu0 %v28
  %130 = vmatpush1.msra.mxu0 %v27
  %131 = vmatprep.subr.mxu0 %v32
  %132 = vmatpush1.msra.mxu0 %v31
  %133 = vmatprep.subr.mxu0 %v36
  %134 = vmatpush1.msra.mxu0 %v35
  %135 = vmatprep.subr.mxu0 %v40
  %136 = vmatpush1.msra.mxu0 %v39
  %137 = vmatprep.subr.mxu0 %v44
  %138 = vmatpush1.msra.mxu0 %v43
  %139 = vmatprep.subr.mxu0 %v48
  %140 = vmatpush1.msra.mxu0 %v47
  %141 = vmatprep.subr.mxu0 %v52
  %142 = vmatpush1.msra.mxu0 %v51
  %143 = vmatprep.subr.mxu0 %v56
  %144 = vmatpush1.msra.mxu0 %v55
  %145 = vmatprep.subr.mxu0 %v60
  %146 = vmatpush1.msra.mxu0 %v59
  %147 = vmatprep.subr.mxu0 %v64
  %148 = vmatpush1.msra.mxu0 %v63
  %149 = vmatprep.subr.mxu0 %v68
  %150 = vmatpush1.msra.mxu0 %v67
  %151 = vmatprep.subr.mxu0 %v72
  %152 = vmatpush1.msra.mxu0 %v71
  %153 = vmatprep.subr.mxu0 0.0
  %154 = vmatpush1.msra.mxu0 0.0
  %155 = vmatprep.subr.mxu0 0.0
  %156 = vmatpush1.msra.mxu0 0.0
  %157 = vmatprep.subr.mxu0 0.0
  %158 = vmatpush1.msra.mxu0 0.0
  %159 = vmatprep.subr.mxu0 0.0
  %160 = vmatpush1.msra.mxu0 0.0
  %161 = vmatprep.subr.mxu0 0.0
  %162 = vmatpush1.msra.mxu0 0.0
  %163 = vmatprep.subr.mxu0 0.0
  %164 = vmatpush1.msra.mxu0 0.0
  %165 = vmatprep.subr.mxu0 0.0
  %166 = vmatpush1.msra.mxu0 0.0
  %167 = vmatprep.subr.mxu0 0.0
  %168 = vmatpush1.msra.mxu0 0.0
  %169 = vmatprep.subr.mxu0 0.0
  %170 = vmatpush1.msra.mxu0 0.0
  %171 = vmatprep.subr.mxu0 0.0
  %172 = vmatpush1.msra.mxu0 0.0
  %173 = vmatprep.subr.mxu0 0.0
  %174 = vmatpush1.msra.mxu0 0.0
  %175 = vmatprep.subr.mxu0 0.0
  %176 = vmatpush1.msra.mxu0 0.0
  %177 = vmatprep.subr.mxu0 0.0
  %178 = vmatpush1.msra.mxu0 0.0
  %179 = vmatprep.subr.mxu0 0.0
  %180 = vmatpush1.msra.mxu0 0.0
  %181 = vmatprep.subr.mxu0 0.0
  %182 = vmatpush1.msra.mxu0 0.0
  %183 = vmatprep.subr.mxu0 0.0
  %184 = vmatpush1.msra.mxu0 0.0
  %185 = vmatprep.mubr.f32.mxu0 0.0
  %186 = vmatmul.mubr.f32.gmra.mrb[0].mxu0 %v95
  %v187 = vpop.f32.mrb[0].mxu0
  %v188 = vadd.f32 %v107, %v187
  %v189 = vpop.f32.mrb[0].mxu0
  %v190 = vadd.f32 %v115, %v189
  %191 = vdwg.mxu0
  %192 = vmatprep.subr.mxu0 %v14
  %193 = vmatpush1.msra.mxu0 %v13
  %194 = vmatprep.subr.mxu0 %v18
  %195 = vmatpush1.msra.mxu0 %v17
  %196 = vmatprep.subr.mxu0 %v22
  %197 = vmatpush1.msra.mxu0 %v21
  %198 = vmatprep.subr.mxu0 %v26
  %199 = vmatpush1.msra.mxu0 %v25
  %200 = vmatprep.subr.mxu0 %v30
  %201 = vmatpush1.msra.mxu0 %v29
  %202 = vmatprep.subr.mxu0 %v34
  %203 = vmatpush1.msra.mxu0 %v33
  %204 = vmatprep.subr.mxu0 %v38
  %205 = vmatpush1.msra.mxu0 %v37
  %206 = vmatprep.subr.mxu0 %v42
  %207 = vmatpush1.msra.mxu0 %v41
  %208 = vmatprep.subr.mxu0 %v46
  %209 = vmatpush1.msra.mxu0 %v45
  %210 = vmatprep.subr.mxu0 %v50
  %211 = vmatpush1.msra.mxu0 %v49
  %212 = vmatprep.subr.mxu0 %v54
  %213 = vmatpush1.msra.mxu0 %v53
  %214 = vmatprep.subr.mxu0 %v58
  %215 = vmatpush1.msra.mxu0 %v57
  %216 = vmatprep.subr.mxu0 %v62
  %217 = vmatpush1.msra.mxu0 %v61
  %218 = vmatprep.subr.mxu0 %v66
  %219 = vmatpush1.msra.mxu0 %v65
  %220 = vmatprep.subr.mxu0 %v70
  %221 = vmatpush1.msra.mxu0 %v69
  %222 = vmatprep.subr.mxu0 %v74
  %223 = vmatpush1.msra.mxu0 %v73
  %224 = vmatprep.subr.mxu0 0.0
  %225 = vmatpush1.msra.mxu0 0.0
  %226 = vmatprep.subr.mxu0 0.0
  %227 = vmatpush1.msra.mxu0 0.0
  %228 = vmatprep.subr.mxu0 0.0
  %229 = vmatpush1.msra.mxu0 0.0
  %230 = vmatprep.subr.mxu0 0.0
  %231 = vmatpush1.msra.mxu0 0.0
  %232 = vmatprep.subr.mxu0 0.0
  %233 = vmatpush1.msra.mxu0 0.0
  %234 = vmatprep.subr.mxu0 0.0
  %235 = vmatpush1.msra.mxu0 0.0
  %236 = vmatprep.subr.mxu0 0.0
  %237 = vmatpush1.msra.mxu0 0.0
  %238 = vmatprep.subr.mxu0 0.0
  %239 = vmatpush1.msra.mxu0 0.0
  %240 = vmatprep.subr.mxu0 0.0
  %241 = vmatpush1.msra.mxu0 0.0
  %242 = vmatprep.subr.mxu0 0.0
  %243 = vmatpush1.msra.mxu0 0.0
  %244 = vmatprep.subr.mxu0 0.0
  %245 = vmatpush1.msra.mxu0 0.0
  %246 = vmatprep.subr.mxu0 0.0
  %247 = vmatpush1.msra.mxu0 0.0
  %248 = vmatprep.subr.mxu0 0.0
  %249 = vmatpush1.msra.mxu0 0.0
  %250 = vmatprep.subr.mxu0 0.0
  %251 = vmatpush1.msra.mxu0 0.0
  %252 = vmatprep.subr.mxu0 0.0
  %253 = vmatpush1.msra.mxu0 0.0
  %254 = vmatprep.subr.mxu0 0.0
  %255 = vmatpush1.msra.mxu0 0.0
  %256 = vmatprep.mubr.f32.mxu0 0.0
  %257 = vmatmul.mubr.f32.gmra.mrb[0].mxu0 %v95
  %v258 = vpop.f32.mrb[0].mxu0
  %v259 = vadd.f32 %v114, %v258
  %v260 = vpop.f32.mrb[0].mxu0
  %v261 = vadd.f32 %v116, %v260
  %262 = vdwg.mxu0
  %v263 = vxor.u32 %v188, 2147483648
  %v264 = vxor.u32 %v190, 2147483648
  %v265 = vxor.u32 %v259, 2147483648
  %v266 = vmul.f32 %v263, 1.442695
  %v267 = vpow.pop %v266
  %v268 = vmul.f32 %v264, 1.442695
  %v269 = vpow.pop %v268
  %v270 = vmul.f32 %v265, 1.442695
  %v271 = vpow.pop %v270
  %v272 = vadd.f32 %v267, 1.0
  %v273 = vadd.f32 %v269, 1.0
  %v274 = vadd.f32 %v271, 1.0
  %v275 = vrcp.pop %v272
  %v276 = vmul.f32 1.0, %v275
  %v277 = vrcp.pop %v273
  %v278 = vmul.f32 1.0, %v277
  %v279 = vrcp.pop %v274
  %v280 = vmul.f32 1.0, %v279
  %v281 = vtanh.pop %v261
  %v282 = vmul.f32 %v278, %v91
  %v283 = vmul.f32 %v276, %v281
  %v284 = vadd.f32 %v282, %v283
  %v285 = vtanh.pop %v284
  %v286 = vmul.f32 %v280, %v285
  %s287 = scalar_lea.vmem %s2, 2
  %288 = vst [vmem:[%s287] sm:$0x3] %v286
  %s289 = scalar_lea.vmem %s0, 16
  %v290 = vld [vmem:[%s289] sm:$0xff]
  %v292 = vcombine.high %v290, %v290
  %v294 = vunpack.c.l.s4 1983009808
  %v295 = vunpack.c.0.s8 %v294
  %v296 = vlaneseq
  %v297 = vshrl.u32 %v296, 7
  %v298 = vsub.s32 %v295, %v297
  %v299 = vrot.slane %v290, %v298
  %v301 = vunpack.c.l.s4 1983009808
  %v302 = vunpack.c.0.s8 %v301
  %v303 = vlaneseq
  %v304 = vshrl.u32 %v303, 7
  %v305 = vsub.s32 %v302, %v304
  %v306 = vrot.slane %v292, %v305
  %v307 = vcombine.high %v299, %v299
  %v308 = vcombine.high %v306, %v306
  %313 = vmatprep.subr.mxu0 %v12
  %314 = vmatpush1.msra.mxu0 %v11
  %315 = vmatprep.subr.mxu0 %v16
  %316 = vmatpush1.msra.mxu0 %v15
  %317 = vmatprep.subr.mxu0 %v20
  %318 = vmatpush1.msra.mxu0 %v19
  %319 = vmatprep.subr.mxu0 %v24
  %320 = vmatpush1.msra.mxu0 %v23
  %321 = vmatprep.subr.mxu0 %v28
  %322 = vmatpush1.msra.mxu0 %v27
  %323 = vmatprep.subr.mxu0 %v32
  %324 = vmatpush1.msra.mxu0 %v31
  %325 = vmatprep.subr.mxu0 %v36
  %326 = vmatpush1.msra.mxu0 %v35
  %327 = vmatprep.subr.mxu0 %v40
  %328 = vmatpush1.msra.mxu0 %v39
  %329 = vmatprep.subr.mxu0 %v44
  %330 = vmatpush1.msra.mxu0 %v43
  %331 = vmatprep.subr.mxu0 %v48
  %332 = vmatpush1.msra.mxu0 %v47
  %333 = vmatprep.subr.mxu0 %v52
  %334 = vmatpush1.msra.mxu0 %v51
  %335 = vmatprep.subr.mxu0 %v56
  %336 = vmatpush1.msra.mxu0 %v55
  %337 = vmatprep.subr.mxu0 %v60
  %338 = vmatpush1.msra.mxu0 %v59
  %339 = vmatprep.subr.mxu0 %v64
  %340 = vmatpush1.msra.mxu0 %v63
  %341 = vmatprep.subr.mxu0 %v68
  %342 = vmatpush1.msra.mxu0 %v67
  %343 = vmatprep.subr.mxu0 %v72
  %344 = vmatpush1.msra.mxu0 %v71
  %345 = vmatprep.subr.mxu0 0.0
  %346 = vmatpush1.msra.mxu0 0.0
  %347 = vmatprep.subr.mxu0 0.0
  %348 = vmatpush1.msra.mxu0 0.0
  %349 = vmatprep.subr.mxu0 0.0
  %350 = vmatpush1.msra.mxu0 0.0
  %351 = vmatprep.subr.mxu0 0.0
  %352 = vmatpush1.msra.mxu0 0.0
  %353 = vmatprep.subr.mxu0 0.0
  %354 = vmatpush1.msra.mxu0 0.0
  %355 = vmatprep.subr.mxu0 0.0
  %356 = vmatpush1.msra.mxu0 0.0
  %357 = vmatprep.subr.mxu0 0.0
  %358 = vmatpush1.msra.mxu0 0.0
  %359 = vmatprep.subr.mxu0 0.0
  %360 = vmatpush1.msra.mxu0 0.0
  %361 = vmatprep.subr.mxu0 0.0
  %362 = vmatpush1.msra.mxu0 0.0
  %363 = vmatprep.subr.mxu0 0.0
  %364 = vmatpush1.msra.mxu0 0.0
  %365 = vmatprep.subr.mxu0 0.0
  %366 = vmatpush1.msra.mxu0 0.0
  %367 = vmatprep.subr.mxu0 0.0
  %368 = vmatpush1.msra.mxu0 0.0
  %369 = vmatprep.subr.mxu0 0.0
  %370 = vmatpush1.msra.mxu0 0.0
  %371 = vmatprep.subr.mxu0 0.0
  %372 = vmatpush1.msra.mxu0 0.0
  %373 = vmatprep.subr.mxu0 0.0
  %374 = vmatpush1.msra.mxu0 0.0
  %375 = vmatprep.subr.mxu0 0.0
  %376 = vmatpush1.msra.mxu0 0.0
  %377 = vmatprep.mubr.f32.mxu0 0.0
  %378 = vmatmul.mubr.f32.gmra.mrb[0].mxu0 %v286
  %v379 = vpop.f32.mrb[0].mxu0
  %v380 = vadd.f32 %v299, %v379
  %v381 = vpop.f32.mrb[0].mxu0
  %v382 = vadd.f32 %v307, %v381
  %383 = vdwg.mxu0
  %384 = vmatprep.subr.mxu0 %v14
  %385 = vmatpush1.msra.mxu0 %v13
  %386 = vmatprep.subr.mxu0 %v18
  %387 = vmatpush1.msra.mxu0 %v17
  %388 = vmatprep.subr.mxu0 %v22
  %389 = vmatpush1.msra.mxu0 %v21
  %390 = vmatprep.subr.mxu0 %v26
  %391 = vmatpush1.msra.mxu0 %v25
  %392 = vmatprep.subr.mxu0 %v30
  %393 = vmatpush1.msra.mxu0 %v29
  %394 = vmatprep.subr.mxu0 %v34
  %395 = vmatpush1.msra.mxu0 %v33
  %396 = vmatprep.subr.mxu0 %v38
  %397 = vmatpush1.msra.mxu0 %v37
  %398 = vmatprep.subr.mxu0 %v42
  %399 = vmatpush1.msra.mxu0 %v41
  %400 = vmatprep.subr.mxu0 %v46
  %401 = vmatpush1.msra.mxu0 %v45
  %402 = vmatprep.subr.mxu0 %v50
  %403 = vmatpush1.msra.mxu0 %v49
  %404 = vmatprep.subr.mxu0 %v54
  %405 = vmatpush1.msra.mxu0 %v53
  %406 = vmatprep.subr.mxu0 %v58
  %407 = vmatpush1.msra.mxu0 %v57
  %408 = vmatprep.subr.mxu0 %v62
  %409 = vmatpush1.msra.mxu0 %v61
  %410 = vmatprep.subr.mxu0 %v66
  %411 = vmatpush1.msra.mxu0 %v65
  %412 = vmatprep.subr.mxu0 %v70
  %413 = vmatpush1.msra.mxu0 %v69
  %414 = vmatprep.subr.mxu0 %v74
  %415 = vmatpush1.msra.mxu0 %v73
  %416 = vmatprep.subr.mxu0 0.0
  %417 = vmatpush1.msra.mxu0 0.0
  %418 = vmatprep.subr.mxu0 0.0
  %419 = vmatpush1.msra.mxu0 0.0
  %420 = vmatprep.subr.mxu0 0.0
  %421 = vmatpush1.msra.mxu0 0.0
  %422 = vmatprep.subr.mxu0 0.0
  %423 = vmatpush1.msra.mxu0 0.0
  %424 = vmatprep.subr.mxu0 0.0
  %425 = vmatpush1.msra.mxu0 0.0
  %426 = vmatprep.subr.mxu0 0.0
  %427 = vmatpush1.msra.mxu0 0.0
  %428 = vmatprep.subr.mxu0 0.0
  %429 = vmatpush1.msra.mxu0 0.0
  %430 = vmatprep.subr.mxu0 0.0
  %431 = vmatpush1.msra.mxu0 0.0
  %432 = vmatprep.subr.mxu0 0.0
  %433 = vmatpush1.msra.mxu0 0.0
  %434 = vmatprep.subr.mxu0 0.0
  %435 = vmatpush1.msra.mxu0 0.0
  %436 = vmatprep.subr.mxu0 0.0
  %437 = vmatpush1.msra.mxu0 0.0
  %438 = vmatprep.subr.mxu0 0.0
  %439 = vmatpush1.msra.mxu0 0.0
  %440 = vmatprep.subr.mxu0 0.0
  %441 = vmatpush1.msra.mxu0 0.0
  %442 = vmatprep.subr.mxu0 0.0
  %443 = vmatpush1.msra.mxu0 0.0
  %444 = vmatprep.subr.mxu0 0.0
  %445 = vmatpush1.msra.mxu0 0.0
  %446 = vmatprep.subr.mxu0 0.0
  %447 = vmatpush1.msra.mxu0 0.0
  %448 = vmatprep.mubr.f32.mxu0 0.0
  %449 = vmatmul.mubr.f32.gmra.mrb[0].mxu0 %v286
  %v450 = vpop.f32.mrb[0].mxu0
  %v451 = vadd.f32 %v306, %v450
  %v452 = vpop.f32.mrb[0].mxu0
  %v453 = vadd.f32 %v308, %v452
  %454 = vdwg.mxu0
  %v455 = vxor.u32 %v380, 2147483648
  %v456 = vxor.u32 %v382, 2147483648
  %v457 = vxor.u32 %v451, 2147483648
  %v458 = vmul.f32 %v455, 1.442695
  %v459 = vpow.pop %v458
  %v460 = vmul.f32 %v456, 1.442695
  %v461 = vpow.pop %v460
  %v462 = vmul.f32 %v457, 1.442695
  %v463 = vpow.pop %v462
  %v464 = vadd.f32 %v459, 1.0
  %v465 = vadd.f32 %v461, 1.0
  %v466 = vadd.f32 %v463, 1.0
  %v467 = vrcp.pop %v464
  %v468 = vmul.f32 1.0, %v467
  %v469 = vrcp.pop %v465
  %v470 = vmul.f32 1.0, %v469
  %v471 = vrcp.pop %v466
  %v472 = vmul.f32 1.0, %v471
  %v473 = vtanh.pop %v453
  %v474 = vmul.f32 %v470, %v284
  %v475 = vmul.f32 %v468, %v473
  %v476 = vadd.f32 %v474, %v475
  %v477 = vtanh.pop %v476
  %v478 = vmul.f32 %v472, %v477
  %s479 = scalar_lea.vmem %s2, 4
  %480 = vst [vmem:[%s479] sm:$0x3] %v478
  %s481 = scalar_lea.vmem %s0, 24
  %v482 = vld [vmem:[%s481] sm:$0xff]
  %v484 = vcombine.high %v482, %v482
  %v486 = vunpack.c.l.s4 1983009808
  %v487 = vunpack.c.0.s8 %v486
  %v488 = vlaneseq
  %v489 = vshrl.u32 %v488, 7
  %v490 = vsub.s32 %v487, %v489
  %v491 = vrot.slane %v482, %v490
  %v493 = vunpack.c.l.s4 1983009808
  %v494 = vunpack.c.0.s8 %v493
  %v495 = vlaneseq
  %v496 = vshrl.u32 %v495, 7
  %v497 = vsub.s32 %v494, %v496
  %v498 = vrot.slane %v484, %v497
  %v499 = vcombine.high %v491, %v491
  %v500 = vcombine.high %v498, %v498
  %505 = vmatprep.subr.mxu0 %v12
  %506 = vmatpush1.msra.mxu0 %v11
  %507 = vmatprep.subr.mxu0 %v16
  %508 = vmatpush1.msra.mxu0 %v15
  %509 = vmatprep.subr.mxu0 %v20
  %510 = vmatpush1.msra.mxu0 %v19
  %511 = vmatprep.subr.mxu0 %v24
  %512 = vmatpush1.msra.mxu0 %v23
  %513 = vmatprep.subr.mxu0 %v28
  %514 = vmatpush1.msra.mxu0 %v27
  %515 = vmatprep.subr.mxu0 %v32
  %516 = vmatpush1.msra.mxu0 %v31
  %517 = vmatprep.subr.mxu0 %v36
  %518 = vmatpush1.msra.mxu0 %v35
  %519 = vmatprep.subr.mxu0 %v40
  %520 = vmatpush1.msra.mxu0 %v39
  %521 = vmatprep.subr.mxu0 %v44
  %522 = vmatpush1.msra.mxu0 %v43
  %523 = vmatprep.subr.mxu0 %v48
  %524 = vmatpush1.msra.mxu0 %v47
  %525 = vmatprep.subr.mxu0 %v52
  %526 = vmatpush1.msra.mxu0 %v51
  %527 = vmatprep.subr.mxu0 %v56
  %528 = vmatpush1.msra.mxu0 %v55
  %529 = vmatprep.subr.mxu0 %v60
  %530 = vmatpush1.msra.mxu0 %v59
  %531 = vmatprep.subr.mxu0 %v64
  %532 = vmatpush1.msra.mxu0 %v63
  %533 = vmatprep.subr.mxu0 %v68
  %534 = vmatpush1.msra.mxu0 %v67
  %535 = vmatprep.subr.mxu0 %v72
  %536 = vmatpush1.msra.mxu0 %v71
  %537 = vmatprep.subr.mxu0 0.0
  %538 = vmatpush1.msra.mxu0 0.0
  %539 = vmatprep.subr.mxu0 0.0
  %540 = vmatpush1.msra.mxu0 0.0
  %541 = vmatprep.subr.mxu0 0.0
  %542 = vmatpush1.msra.mxu0 0.0
  %543 = vmatprep.subr.mxu0 0.0
  %544 = vmatpush1.msra.mxu0 0.0
  %545 = vmatprep.subr.mxu0 0.0
  %546 = vmatpush1.msra.mxu0 0.0
  %547 = vmatprep.subr.mxu0 0.0
  %548 = vmatpush1.msra.mxu0 0.0
  %549 = vmatprep.subr.mxu0 0.0
  %550 = vmatpush1.msra.mxu0 0.0
  %551 = vmatprep.subr.mxu0 0.0
  %552 = vmatpush1.msra.mxu0 0.0
  %553 = vmatprep.subr.mxu0 0.0
  %554 = vmatpush1.msra.mxu0 0.0
  %555 = vmatprep.subr.mxu0 0.0
  %556 = vmatpush1.msra.mxu0 0.0
  %557 = vmatprep.subr.mxu0 0.0
  %558 = vmatpush1.msra.mxu0 0.0
  %559 = vmatprep.subr.mxu0 0.0
  %560 = vmatpush1.msra.mxu0 0.0
  %561 = vmatprep.subr.mxu0 0.0
  %562 = vmatpush1.msra.mxu0 0.0
  %563 = vmatprep.subr.mxu0 0.0
  %564 = vmatpush1.msra.mxu0 0.0
  %565 = vmatprep.subr.mxu0 0.0
  %566 = vmatpush1.msra.mxu0 0.0
  %567 = vmatprep.subr.mxu0 0.0
  %568 = vmatpush1.msra.mxu0 0.0
  %569 = vmatprep.mubr.f32.mxu0 0.0
  %570 = vmatmul.mubr.f32.gmra.mrb[0].mxu0 %v478
  %v571 = vpop.f32.mrb[0].mxu0
  %v572 = vadd.f32 %v491, %v571
  %v573 = vpop.f32.mrb[0].mxu0
  %v574 = vadd.f32 %v499, %v573
  %575 = vdwg.mxu0
  %576 = vmatprep.subr.mxu0 %v14
  %577 = vmatpush1.msra.mxu0 %v13
  %578 = vmatprep.subr.mxu0 %v18
  %579 = vmatpush1.msra.mxu0 %v17
  %580 = vmatprep.subr.mxu0 %v22
  %581 = vmatpush1.msra.mxu0 %v21
  %582 = vmatprep.subr.mxu0 %v26
  %583 = vmatpush1.msra.mxu0 %v25
  %584 = vmatprep.subr.mxu0 %v30
  %585 = vmatpush1.msra.mxu0 %v29
  %586 = vmatprep.subr.mxu0 %v34
  %587 = vmatpush1.msra.mxu0 %v33
  %588 = vmatprep.subr.mxu0 %v38
  %589 = vmatpush1.msra.mxu0 %v37
  %590 = vmatprep.subr.mxu0 %v42
  %591 = vmatpush1.msra.mxu0 %v41
  %592 = vmatprep.subr.mxu0 %v46
  %593 = vmatpush1.msra.mxu0 %v45
  %594 = vmatprep.subr.mxu0 %v50
  %595 = vmatpush1.msra.mxu0 %v49
  %596 = vmatprep.subr.mxu0 %v54
  %597 = vmatpush1.msra.mxu0 %v53
  %598 = vmatprep.subr.mxu0 %v58
  %599 = vmatpush1.msra.mxu0 %v57
  %600 = vmatprep.subr.mxu0 %v62
  %601 = vmatpush1.msra.mxu0 %v61
  %602 = vmatprep.subr.mxu0 %v66
  %603 = vmatpush1.msra.mxu0 %v65
  %604 = vmatprep.subr.mxu0 %v70
  %605 = vmatpush1.msra.mxu0 %v69
  %606 = vmatprep.subr.mxu0 %v74
  %607 = vmatpush1.msra.mxu0 %v73
  %608 = vmatprep.subr.mxu0 0.0
  %609 = vmatpush1.msra.mxu0 0.0
  %610 = vmatprep.subr.mxu0 0.0
  %611 = vmatpush1.msra.mxu0 0.0
  %612 = vmatprep.subr.mxu0 0.0
  %613 = vmatpush1.msra.mxu0 0.0
  %614 = vmatprep.subr.mxu0 0.0
  %615 = vmatpush1.msra.mxu0 0.0
  %616 = vmatprep.subr.mxu0 0.0
  %617 = vmatpush1.msra.mxu0 0.0
  %618 = vmatprep.subr.mxu0 0.0
  %619 = vmatpush1.msra.mxu0 0.0
  %620 = vmatprep.subr.mxu0 0.0
  %621 = vmatpush1.msra.mxu0 0.0
  %622 = vmatprep.subr.mxu0 0.0
  %623 = vmatpush1.msra.mxu0 0.0
  %624 = vmatprep.subr.mxu0 0.0
  %625 = vmatpush1.msra.mxu0 0.0
  %626 = vmatprep.subr.mxu0 0.0
  %627 = vmatpush1.msra.mxu0 0.0
  %628 = vmatprep.subr.mxu0 0.0
  %629 = vmatpush1.msra.mxu0 0.0
  %630 = vmatprep.subr.mxu0 0.0
  %631 = vmatpush1.msra.mxu0 0.0
  %632 = vmatprep.subr.mxu0 0.0
  %633 = vmatpush1.msra.mxu0 0.0
  %634 = vmatprep.subr.mxu0 0.0
  %635 = vmatpush1.msra.mxu0 0.0
  %636 = vmatprep.subr.mxu0 0.0
  %637 = vmatpush1.msra.mxu0 0.0
  %638 = vmatprep.subr.mxu0 0.0
  %639 = vmatpush1.msra.mxu0 0.0
  %640 = vmatprep.mubr.f32.mxu0 0.0
  %641 = vmatmul.mubr.f32.gmra.mrb[0].mxu0 %v478
  %v642 = vpop.f32.mrb[0].mxu0
  %v643 = vadd.f32 %v498, %v642
  %v644 = vpop.f32.mrb[0].mxu0
  %v645 = vadd.f32 %v500, %v644
  %646 = vdwg.mxu0
  %v647 = vxor.u32 %v572, 2147483648
  %v648 = vxor.u32 %v574, 2147483648
  %v649 = vxor.u32 %v643, 2147483648
  %v650 = vmul.f32 %v647, 1.442695
  %v651 = vpow.pop %v650
  %v652 = vmul.f32 %v648, 1.442695
  %v653 = vpow.pop %v652
  %v654 = vmul.f32 %v649, 1.442695
  %v655 = vpow.pop %v654
  %v656 = vadd.f32 %v651, 1.0
  %v657 = vadd.f32 %v653, 1.0
  %v658 = vadd.f32 %v655, 1.0
  %v659 = vrcp.pop %v656
  %v660 = vmul.f32 1.0, %v659
  %v661 = vrcp.pop %v657
  %v662 = vmul.f32 1.0, %v661
  %v663 = vrcp.pop %v658
  %v664 = vmul.f32 1.0, %v663
  %v665 = vtanh.pop %v645
  %v666 = vmul.f32 %v662, %v476
  %v667 = vmul.f32 %v660, %v665
  %v668 = vadd.f32 %v666, %v667
  %v669 = vtanh.pop %v668
  %v670 = vmul.f32 %v664, %v669
  %s671 = scalar_lea.vmem %s2, 6
  %672 = vst [vmem:[%s671] sm:$0x3] %v670
  %s673 = scalar_lea.vmem %s0, 32
  %v674 = vld [vmem:[%s673] sm:$0xff]
  %v676 = vcombine.high %v674, %v674
  %v678 = vunpack.c.l.s4 1983009808
  %v679 = vunpack.c.0.s8 %v678
  %v680 = vlaneseq
  %v681 = vshrl.u32 %v680, 7
  %v682 = vsub.s32 %v679, %v681
  %v683 = vrot.slane %v674, %v682
  %v685 = vunpack.c.l.s4 1983009808
  %v686 = vunpack.c.0.s8 %v685
  %v687 = vlaneseq
  %v688 = vshrl.u32 %v687, 7
  %v689 = vsub.s32 %v686, %v688
  %v690 = vrot.slane %v676, %v689
  %v691 = vcombine.high %v683, %v683
  %v692 = vcombine.high %v690, %v690
  %697 = vmatprep.subr.mxu0 %v12
  %698 = vmatpush1.msra.mxu0 %v11
  %699 = vmatprep.subr.mxu0 %v16
  %700 = vmatpush1.msra.mxu0 %v15
  %701 = vmatprep.subr.mxu0 %v20
  %702 = vmatpush1.msra.mxu0 %v19
  %703 = vmatprep.subr.mxu0 %v24
  %704 = vmatpush1.msra.mxu0 %v23
  %705 = vmatprep.subr.mxu0 %v28
  %706 = vmatpush1.msra.mxu0 %v27
  %707 = vmatprep.subr.mxu0 %v32
  %708 = vmatpush1.msra.mxu0 %v31
  %709 = vmatprep.subr.mxu0 %v36
  %710 = vmatpush1.msra.mxu0 %v35
  %711 = vmatprep.subr.mxu0 %v40
  %712 = vmatpush1.msra.mxu0 %v39
  %713 = vmatprep.subr.mxu0 %v44
  %714 = vmatpush1.msra.mxu0 %v43
  %715 = vmatprep.subr.mxu0 %v48
  %716 = vmatpush1.msra.mxu0 %v47
  %717 = vmatprep.subr.mxu0 %v52
  %718 = vmatpush1.msra.mxu0 %v51
  %719 = vmatprep.subr.mxu0 %v56
  %720 = vmatpush1.msra.mxu0 %v55
  %721 = vmatprep.subr.mxu0 %v60
  %722 = vmatpush1.msra.mxu0 %v59
  %723 = vmatprep.subr.mxu0 %v64
  %724 = vmatpush1.msra.mxu0 %v63
  %725 = vmatprep.subr.mxu0 %v68
  %726 = vmatpush1.msra.mxu0 %v67
  %727 = vmatprep.subr.mxu0 %v72
  %728 = vmatpush1.msra.mxu0 %v71
  %729 = vmatprep.subr.mxu0 0.0
  %730 = vmatpush1.msra.mxu0 0.0
  %731 = vmatprep.subr.mxu0 0.0
  %732 = vmatpush1.msra.mxu0 0.0
  %733 = vmatprep.subr.mxu0 0.0
  %734 = vmatpush1.msra.mxu0 0.0
  %735 = vmatprep.subr.mxu0 0.0
  %736 = vmatpush1.msra.mxu0 0.0
  %737 = vmatprep.subr.mxu0 0.0
  %738 = vmatpush1.msra.mxu0 0.0
  %739 = vmatprep.subr.mxu0 0.0
  %740 = vmatpush1.msra.mxu0 0.0
  %741 = vmatprep.subr.mxu0 0.0
  %742 = vmatpush1.msra.mxu0 0.0
  %743 = vmatprep.subr.mxu0 0.0
  %744 = vmatpush1.msra.mxu0 0.0
  %745 = vmatprep.subr.mxu0 0.0
  %746 = vmatpush1.msra.mxu0 0.0
  %747 = vmatprep.subr.mxu0 0.0
  %748 = vmatpush1.msra.mxu0 0.0
  %749 = vmatprep.subr.mxu0 0.0
  %750 = vmatpush1.msra.mxu0 0.0
  %751 = vmatprep.subr.mxu0 0.0
  %752 = vmatpush1.msra.mxu0 0.0
  %753 = vmatprep.subr.mxu0 0.0
  %754 = vmatpush1.msra.mxu0 0.0
  %755 = vmatprep.subr.mxu0 0.0
  %756 = vmatpush1.msra.mxu0 0.0
  %757 = vmatprep.subr.mxu0 0.0
  %758 = vmatpush1.msra.mxu0 0.0
  %759 = vmatprep.subr.mxu0 0.0
  %760 = vmatpush1.msra.mxu0 0.0
  %761 = vmatprep.mubr.f32.mxu0 0.0
  %762 = vmatmul.mubr.f32.gmra.mrb[0].mxu0 %v670
  %v763 = vpop.f32.mrb[0].mxu0
  %v764 = vadd.f32 %v683, %v763
  %v765 = vpop.f32.mrb[0].mxu0
  %v766 = vadd.f32 %v691, %v765
  %767 = vdwg.mxu0
  %768 = vmatprep.subr.mxu0 %v14
  %769 = vmatpush1.msra.mxu0 %v13
  %770 = vmatprep.subr.mxu0 %v18
  %771 = vmatpush1.msra.mxu0 %v17
  %772 = vmatprep.subr.mxu0 %v22
  %773 = vmatpush1.msra.mxu0 %v21
  %774 = vmatprep.subr.mxu0 %v26
  %775 = vmatpush1.msra.mxu0 %v25
  %776 = vmatprep.subr.mxu0 %v30
  %777 = vmatpush1.msra.mxu0 %v29
  %778 = vmatprep.subr.mxu0 %v34
  %779 = vmatpush1.msra.mxu0 %v33
  %780 = vmatprep.subr.mxu0 %v38
  %781 = vmatpush1.msra.mxu0 %v37
  %782 = vmatprep.subr.mxu0 %v42
  %783 = vmatpush1.msra.mxu0 %v41
  %784 = vmatprep.subr.mxu0 %v46
  %785 = vmatpush1.msra.mxu0 %v45
  %786 = vmatprep.subr.mxu0 %v50
  %787 = vmatpush1.msra.mxu0 %v49
  %788 = vmatprep.subr.mxu0 %v54
  %789 = vmatpush1.msra.mxu0 %v53
  %790 = vmatprep.subr.mxu0 %v58
  %791 = vmatpush1.msra.mxu0 %v57
  %792 = vmatprep.subr.mxu0 %v62
  %793 = vmatpush1.msra.mxu0 %v61
  %794 = vmatprep.subr.mxu0 %v66
  %795 = vmatpush1.msra.mxu0 %v65
  %796 = vmatprep.subr.mxu0 %v70
  %797 = vmatpush1.msra.mxu0 %v69
  %798 = vmatprep.subr.mxu0 %v74
  %799 = vmatpush1.msra.mxu0 %v73
  %800 = vmatprep.subr.mxu0 0.0
  %801 = vmatpush1.msra.mxu0 0.0
  %802 = vmatprep.subr.mxu0 0.0
  %803 = vmatpush1.msra.mxu0 0.0
  %804 = vmatprep.subr.mxu0 0.0
  %805 = vmatpush1.msra.mxu0 0.0
  %806 = vmatprep.subr.mxu0 0.0
  %807 = vmatpush1.msra.mxu0 0.0
  %808 = vmatprep.subr.mxu0 0.0
  %809 = vmatpush1.msra.mxu0 0.0
  %810 = vmatprep.subr.mxu0 0.0
  %811 = vmatpush1.msra.mxu0 0.0
  %812 = vmatprep.subr.mxu0 0.0
  %813 = vmatpush1.msra.mxu0 0.0
  %814 = vmatprep.subr.mxu0 0.0
  %815 = vmatpush1.msra.mxu0 0.0
  %816 = vmatprep.subr.mxu0 0.0
  %817 = vmatpush1.msra.mxu0 0.0
  %818 = vmatprep.subr.mxu0 0.0
  %819 = vmatpush1.msra.mxu0 0.0
  %820 = vmatprep.subr.mxu0 0.0
  %821 = vmatpush1.msra.mxu0 0.0
  %822 = vmatprep.subr.mxu0 0.0
  %823 = vmatpush1.msra.mxu0 0.0
  %824 = vmatprep.subr.mxu0 0.0
  %825 = vmatpush1.msra.mxu0 0.0
  %826 = vmatprep.subr.mxu0 0.0
  %827 = vmatpush1.msra.mxu0 0.0
  %828 = vmatprep.subr.mxu0 0.0
  %829 = vmatpush1.msra.mxu0 0.0
  %830 = vmatprep.subr.mxu0 0.0
  %831 = vmatpush1.msra.mxu0 0.0
  %832 = vmatprep.mubr.f32.mxu0 0.0
  %833 = vmatmul.mubr.f32.gmra.mrb[0].mxu0 %v670
  %v834 = vpop.f32.mrb[0].mxu0
  %v835 = vadd.f32 %v690, %v834
  %v836 = vpop.f32.mrb[0].mxu0
  %v837 = vadd.f32 %v692, %v836
  %838 = vdwg.mxu0
  %v839 = vxor.u32 %v764, 2147483648
  %v840 = vxor.u32 %v766, 2147483648
  %v841 = vxor.u32 %v835, 2147483648
  %v842 = vmul.f32 %v839, 1.442695
  %v843 = vpow.pop %v842
  %v844 = vmul.f32 %v840, 1.442695
  %v845 = vpow.pop %v844
  %v846 = vmul.f32 %v841, 1.442695
  %v847 = vpow.pop %v846
  %v848 = vadd.f32 %v843, 1.0
  %v849 = vadd.f32 %v845, 1.0
  %v850 = vadd.f32 %v847, 1.0
  %v851 = vrcp.pop %v848
  %v852 = vmul.f32 1.0, %v851
  %v853 = vrcp.pop %v849
  %v854 = vmul.f32 1.0, %v853
  %v855 = vrcp.pop %v850
  %v856 = vmul.f32 1.0, %v855
  %v857 = vtanh.pop %v837
  %v858 = vmul.f32 %v854, %v668
  %v859 = vmul.f32 %v852, %v857
  %v860 = vadd.f32 %v858, %v859
  %v861 = vtanh.pop %v860
  %v862 = vmul.f32 %v856, %v861
  %s863 = scalar_lea.vmem %s2, 8
  %864 = vst [vmem:[%s863] sm:$0x3] %v862
  %s865 = scalar_lea.vmem %s0, 40
  %v866 = vld [vmem:[%s865] sm:$0xff]
  %v868 = vcombine.high %v866, %v866
  %v870 = vunpack.c.l.s4 1983009808
  %v871 = vunpack.c.0.s8 %v870
  %v872 = vlaneseq
  %v873 = vshrl.u32 %v872, 7
  %v874 = vsub.s32 %v871, %v873
  %v875 = vrot.slane %v866, %v874
  %v877 = vunpack.c.l.s4 1983009808
  %v878 = vunpack.c.0.s8 %v877
  %v879 = vlaneseq
  %v880 = vshrl.u32 %v879, 7
  %v881 = vsub.s32 %v878, %v880
  %v882 = vrot.slane %v868, %v881
  %v883 = vcombine.high %v875, %v875
  %v884 = vcombine.high %v882, %v882
  %889 = vmatprep.subr.mxu0 %v12
  %890 = vmatpush1.msra.mxu0 %v11
  %891 = vmatprep.subr.mxu0 %v16
  %892 = vmatpush1.msra.mxu0 %v15
  %893 = vmatprep.subr.mxu0 %v20
  %894 = vmatpush1.msra.mxu0 %v19
  %895 = vmatprep.subr.mxu0 %v24
  %896 = vmatpush1.msra.mxu0 %v23
  %897 = vmatprep.subr.mxu0 %v28
  %898 = vmatpush1.msra.mxu0 %v27
  %899 = vmatprep.subr.mxu0 %v32
  %900 = vmatpush1.msra.mxu0 %v31
  %901 = vmatprep.subr.mxu0 %v36
  %902 = vmatpush1.msra.mxu0 %v35
  %903 = vmatprep.subr.mxu0 %v40
  %904 = vmatpush1.msra.mxu0 %v39
  %905 = vmatprep.subr.mxu0 %v44
  %906 = vmatpush1.msra.mxu0 %v43
  %907 = vmatprep.subr.mxu0 %v48
  %908 = vmatpush1.msra.mxu0 %v47
  %909 = vmatprep.subr.mxu0 %v52
  %910 = vmatpush1.msra.mxu0 %v51
  %911 = vmatprep.subr.mxu0 %v56
  %912 = vmatpush1.msra.mxu0 %v55
  %913 = vmatprep.subr.mxu0 %v60
  %914 = vmatpush1.msra.mxu0 %v59
  %915 = vmatprep.subr.mxu0 %v64
  %916 = vmatpush1.msra.mxu0 %v63
  %917 = vmatprep.subr.mxu0 %v68
  %918 = vmatpush1.msra.mxu0 %v67
  %919 = vmatprep.subr.mxu0 %v72
  %920 = vmatpush1.msra.mxu0 %v71
  %921 = vmatprep.subr.mxu0 0.0
  %922 = vmatpush1.msra.mxu0 0.0
  %923 = vmatprep.subr.mxu0 0.0
  %924 = vmatpush1.msra.mxu0 0.0
  %925 = vmatprep.subr.mxu0 0.0
  %926 = vmatpush1.msra.mxu0 0.0
  %927 = vmatprep.subr.mxu0 0.0
  %928 = vmatpush1.msra.mxu0 0.0
  %929 = vmatprep.subr.mxu0 0.0
  %930 = vmatpush1.msra.mxu0 0.0
  %931 = vmatprep.subr.mxu0 0.0
  %932 = vmatpush1.msra.mxu0 0.0
  %933 = vmatprep.subr.mxu0 0.0
  %934 = vmatpush1.msra.mxu0 0.0
  %935 = vmatprep.subr.mxu0 0.0
  %936 = vmatpush1.msra.mxu0 0.0
  %937 = vmatprep.subr.mxu0 0.0
  %938 = vmatpush1.msra.mxu0 0.0
  %939 = vmatprep.subr.mxu0 0.0
  %940 = vmatpush1.msra.mxu0 0.0
  %941 = vmatprep.subr.mxu0 0.0
  %942 = vmatpush1.msra.mxu0 0.0
  %943 = vmatprep.subr.mxu0 0.0
  %944 = vmatpush1.msra.mxu0 0.0
  %945 = vmatprep.subr.mxu0 0.0
  %946 = vmatpush1.msra.mxu0 0.0
  %947 = vmatprep.subr.mxu0 0.0
  %948 = vmatpush1.msra.mxu0 0.0
  %949 = vmatprep.subr.mxu0 0.0
  %950 = vmatpush1.msra.mxu0 0.0
  %951 = vmatprep.subr.mxu0 0.0
  %952 = vmatpush1.msra.mxu0 0.0
  %953 = vmatprep.mubr.f32.mxu0 0.0
  %954 = vmatmul.mubr.f32.gmra.mrb[0].mxu0 %v862
  %v955 = vpop.f32.mrb[0].mxu0
  %v956 = vadd.f32 %v875, %v955
  %v957 = vpop.f32.mrb[0].mxu0
  %v958 = vadd.f32 %v883, %v957
  %959 = vdwg.mxu0
  %960 = vmatprep.subr.mxu0 %v14
  %961 = vmatpush1.msra.mxu0 %v13
  %962 = vmatprep.subr.mxu0 %v18
  %963 = vmatpush1.msra.mxu0 %v17
  %964 = vmatprep.subr.mxu0 %v22
  %965 = vmatpush1.msra.mxu0 %v21
  %966 = vmatprep.subr.mxu0 %v26
  %967 = vmatpush1.msra.mxu0 %v25
  %968 = vmatprep.subr.mxu0 %v30
  %969 = vmatpush1.msra.mxu0 %v29
  %970 = vmatprep.subr.mxu0 %v34
  %971 = vmatpush1.msra.mxu0 %v33
  %972 = vmatprep.subr.mxu0 %v38
  %973 = vmatpush1.msra.mxu0 %v37
  %974 = vmatprep.subr.mxu0 %v42
  %975 = vmatpush1.msra.mxu0 %v41
  %976 = vmatprep.subr.mxu0 %v46
  %977 = vmatpush1.msra.mxu0 %v45
  %978 = vmatprep.subr.mxu0 %v50
  %979 = vmatpush1.msra.mxu0 %v49
  %980 = vmatprep.subr.mxu0 %v54
  %981 = vmatpush1.msra.mxu0 %v53
  %982 = vmatprep.subr.mxu0 %v58
  %983 = vmatpush1.msra.mxu0 %v57
  %984 = vmatprep.subr.mxu0 %v62
  %985 = vmatpush1.msra.mxu0 %v61
  %986 = vmatprep.subr.mxu0 %v66
  %987 = vmatpush1.msra.mxu0 %v65
  %988 = vmatprep.subr.mxu0 %v70
  %989 = vmatpush1.msra.mxu0 %v69
  %990 = vmatprep.subr.mxu0 %v74
  %991 = vmatpush1.msra.mxu0 %v73
  %992 = vmatprep.subr.mxu0 0.0
  %993 = vmatpush1.msra.mxu0 0.0
  %994 = vmatprep.subr.mxu0 0.0
  %995 = vmatpush1.msra.mxu0 0.0
  %996 = vmatprep.subr.mxu0 0.0
  %997 = vmatpush1.msra.mxu0 0.0
  %998 = vmatprep.subr.mxu0 0.0
  %999 = vmatpush1.msra.mxu0 0.0
  %1000 = vmatprep.subr.mxu0 0.0
  %1001 = vmatpush1.msra.mxu0 0.0
  %1002 = vmatprep.subr.mxu0 0.0
  %1003 = vmatpush1.msra.mxu0 0.0
  %1004 = vmatprep.subr.mxu0 0.0
  %1005 = vmatpush1.msra.mxu0 0.0
  %1006 = vmatprep.subr.mxu0 0.0
  %1007 = vmatpush1.msra.mxu0 0.0
  %1008 = vmatprep.subr.mxu0 0.0
  %1009 = vmatpush1.msra.mxu0 0.0
  %1010 = vmatprep.subr.mxu0 0.0
  %1011 = vmatpush1.msra.mxu0 0.0
  %1012 = vmatprep.subr.mxu0 0.0
  %1013 = vmatpush1.msra.mxu0 0.0
  %1014 = vmatprep.subr.mxu0 0.0
  %1015 = vmatpush1.msra.mxu0 0.0
  %1016 = vmatprep.subr.mxu0 0.0
  %1017 = vmatpush1.msra.mxu0 0.0
  %1018 = vmatprep.subr.mxu0 0.0
  %1019 = vmatpush1.msra.mxu0 0.0
  %1020 = vmatprep.subr.mxu0 0.0
  %1021 = vmatpush1.msra.mxu0 0.0
  %1022 = vmatprep.subr.mxu0 0.0
  %1023 = vmatpush1.msra.mxu0 0.0
  %1024 = vmatprep.mubr.f32.mxu0 0.0
  %1025 = vmatmul.mubr.f32.gmra.mrb[0].mxu0 %v862
  %v1026 = vpop.f32.mrb[0].mxu0
  %v1027 = vadd.f32 %v882, %v1026
  %v1028 = vpop.f32.mrb[0].mxu0
  %v1029 = vadd.f32 %v884, %v1028
  %1030 = vdwg.mxu0
  %v1031 = vxor.u32 %v956, 2147483648
  %v1032 = vxor.u32 %v958, 2147483648
  %v1033 = vxor.u32 %v1027, 2147483648
  %v1034 = vmul.f32 %v1031, 1.442695
  %v1035 = vpow.pop %v1034
  %v1036 = vmul.f32 %v1032, 1.442695
  %v1037 = vpow.pop %v1036
  %v1038 = vmul.f32 %v1033, 1.442695
  %v1039 = vpow.pop %v1038
  %v1040 = vadd.f32 %v1035, 1.0
  %v1041 = vadd.f32 %v1037, 1.0
  %v1042 = vadd.f32 %v1039, 1.0
  %v1043 = vrcp.pop %v1040
  %v1044 = vmul.f32 1.0, %v1043
  %v1045 = vrcp.pop %v1041
  %v1046 = vmul.f32 1.0, %v1045
  %v1047 = vrcp.pop %v1042
  %v1048 = vmul.f32 1.0, %v1047
  %v1049 = vtanh.pop %v1029
  %v1050 = vmul.f32 %v1046, %v860
  %v1051 = vmul.f32 %v1044, %v1049
  %v1052 = vadd.f32 %v1050, %v1051
  %v1053 = vtanh.pop %v1052
  %v1054 = vmul.f32 %v1048, %v1053
  %s1055 = scalar_lea.vmem %s2, 10
  %1056 = vst [vmem:[%s1055] sm:$0x3] %v1054
  %s1057 = scalar_lea.vmem %s0, 48
  %v1058 = vld [vmem:[%s1057] sm:$0xff]
  %v1060 = vcombine.high %v1058, %v1058
  %v1062 = vunpack.c.l.s4 1983009808
  %v1063 = vunpack.c.0.s8 %v1062
  %v1064 = vlaneseq
  %v1065 = vshrl.u32 %v1064, 7
  %v1066 = vsub.s32 %v1063, %v1065
  %v1067 = vrot.slane %v1058, %v1066
  %v1069 = vunpack.c.l.s4 1983009808
  %v1070 = vunpack.c.0.s8 %v1069
  %v1071 = vlaneseq
  %v1072 = vshrl.u32 %v1071, 7
  %v1073 = vsub.s32 %v1070, %v1072
  %v1074 = vrot.slane %v1060, %v1073
  %v1075 = vcombine.high %v1067, %v1067
  %v1076 = vcombine.high %v1074, %v1074
  %1081 = vmatprep.subr.mxu0 %v12
  %1082 = vmatpush1.msra.mxu0 %v11
  %1083 = vmatprep.subr.mxu0 %v16
  %1084 = vmatpush1.msra.mxu0 %v15
  %1085 = vmatprep.subr.mxu0 %v20
  %1086 = vmatpush1.msra.mxu0 %v19
  %1087 = vmatprep.subr.mxu0 %v24
  %1088 = vmatpush1.msra.mxu0 %v23
  %1089 = vmatprep.subr.mxu0 %v28
  %1090 = vmatpush1.msra.mxu0 %v27
  %1091 = vmatprep.subr.mxu0 %v32
  %1092 = vmatpush1.msra.mxu0 %v31
  %1093 = vmatprep.subr.mxu0 %v36
  %1094 = vmatpush1.msra.mxu0 %v35
  %1095 = vmatprep.subr.mxu0 %v40
  %1096 = vmatpush1.msra.mxu0 %v39
  %1097 = vmatprep.subr.mxu0 %v44
  %1098 = vmatpush1.msra.mxu0 %v43
  %1099 = vmatprep.subr.mxu0 %v48
  %1100 = vmatpush1.msra.mxu0 %v47
  %1101 = vmatprep.subr.mxu0 %v52
  %1102 = vmatpush1.msra.mxu0 %v51
  %1103 = vmatprep.subr.mxu0 %v56
  %1104 = vmatpush1.msra.mxu0 %v55
  %1105 = vmatprep.subr.mxu0 %v60
  %1106 = vmatpush1.msra.mxu0 %v59
  %1107 = vmatprep.subr.mxu0 %v64
  %1108 = vmatpush1.msra.mxu0 %v63
  %1109 = vmatprep.subr.mxu0 %v68
  %1110 = vmatpush1.msra.mxu0 %v67
  %1111 = vmatprep.subr.mxu0 %v72
  %1112 = vmatpush1.msra.mxu0 %v71
  %1113 = vmatprep.subr.mxu0 0.0
  %1114 = vmatpush1.msra.mxu0 0.0
  %1115 = vmatprep.subr.mxu0 0.0
  %1116 = vmatpush1.msra.mxu0 0.0
  %1117 = vmatprep.subr.mxu0 0.0
  %1118 = vmatpush1.msra.mxu0 0.0
  %1119 = vmatprep.subr.mxu0 0.0
  %1120 = vmatpush1.msra.mxu0 0.0
  %1121 = vmatprep.subr.mxu0 0.0
  %1122 = vmatpush1.msra.mxu0 0.0
  %1123 = vmatprep.subr.mxu0 0.0
  %1124 = vmatpush1.msra.mxu0 0.0
  %1125 = vmatprep.subr.mxu0 0.0
  %1126 = vmatpush1.msra.mxu0 0.0
  %1127 = vmatprep.subr.mxu0 0.0
  %1128 = vmatpush1.msra.mxu0 0.0
  %1129 = vmatprep.subr.mxu0 0.0
  %1130 = vmatpush1.msra.mxu0 0.0
  %1131 = vmatprep.subr.mxu0 0.0
  %1132 = vmatpush1.msra.mxu0 0.0
  %1133 = vmatprep.subr.mxu0 0.0
  %1134 = vmatpush1.msra.mxu0 0.0
  %1135 = vmatprep.subr.mxu0 0.0
  %1136 = vmatpush1.msra.mxu0 0.0
  %1137 = vmatprep.subr.mxu0 0.0
  %1138 = vmatpush1.msra.mxu0 0.0
  %1139 = vmatprep.subr.mxu0 0.0
  %1140 = vmatpush1.msra.mxu0 0.0
  %1141 = vmatprep.subr.mxu0 0.0
  %1142 = vmatpush1.msra.mxu0 0.0
  %1143 = vmatprep.subr.mxu0 0.0
  %1144 = vmatpush1.msra.mxu0 0.0
  %1145 = vmatprep.mubr.f32.mxu0 0.0
  %1146 = vmatmul.mubr.f32.gmra.mrb[0].mxu0 %v1054
  %v1147 = vpop.f32.mrb[0].mxu0
  %v1148 = vadd.f32 %v1067, %v1147
  %v1149 = vpop.f32.mrb[0].mxu0
  %v1150 = vadd.f32 %v1075, %v1149
  %1151 = vdwg.mxu0
  %1152 = vmatprep.subr.mxu0 %v14
  %1153 = vmatpush1.msra.mxu0 %v13
  %1154 = vmatprep.subr.mxu0 %v18
  %1155 = vmatpush1.msra.mxu0 %v17
  %1156 = vmatprep.subr.mxu0 %v22
  %1157 = vmatpush1.msra.mxu0 %v21
  %1158 = vmatprep.subr.mxu0 %v26
  %1159 = vmatpush1.msra.mxu0 %v25
  %1160 = vmatprep.subr.mxu0 %v30
  %1161 = vmatpush1.msra.mxu0 %v29
  %1162 = vmatprep.subr.mxu0 %v34
  %1163 = vmatpush1.msra.mxu0 %v33
  %1164 = vmatprep.subr.mxu0 %v38
  %1165 = vmatpush1.msra.mxu0 %v37
  %1166 = vmatprep.subr.mxu0 %v42
  %1167 = vmatpush1.msra.mxu0 %v41
  %1168 = vmatprep.subr.mxu0 %v46
  %1169 = vmatpush1.msra.mxu0 %v45
  %1170 = vmatprep.subr.mxu0 %v50
  %1171 = vmatpush1.msra.mxu0 %v49
  %1172 = vmatprep.subr.mxu0 %v54
  %1173 = vmatpush1.msra.mxu0 %v53
  %1174 = vmatprep.subr.mxu0 %v58
  %1175 = vmatpush1.msra.mxu0 %v57
  %1176 = vmatprep.subr.mxu0 %v62
  %1177 = vmatpush1.msra.mxu0 %v61
  %1178 = vmatprep.subr.mxu0 %v66
  %1179 = vmatpush1.msra.mxu0 %v65
  %1180 = vmatprep.subr.mxu0 %v70
  %1181 = vmatpush1.msra.mxu0 %v69
  %1182 = vmatprep.subr.mxu0 %v74
  %1183 = vmatpush1.msra.mxu0 %v73
  %1184 = vmatprep.subr.mxu0 0.0
  %1185 = vmatpush1.msra.mxu0 0.0
  %1186 = vmatprep.subr.mxu0 0.0
  %1187 = vmatpush1.msra.mxu0 0.0
  %1188 = vmatprep.subr.mxu0 0.0
  %1189 = vmatpush1.msra.mxu0 0.0
  %1190 = vmatprep.subr.mxu0 0.0
  %1191 = vmatpush1.msra.mxu0 0.0
  %1192 = vmatprep.subr.mxu0 0.0
  %1193 = vmatpush1.msra.mxu0 0.0
  %1194 = vmatprep.subr.mxu0 0.0
  %1195 = vmatpush1.msra.mxu0 0.0
  %1196 = vmatprep.subr.mxu0 0.0
  %1197 = vmatpush1.msra.mxu0 0.0
  %1198 = vmatprep.subr.mxu0 0.0
  %1199 = vmatpush1.msra.mxu0 0.0
  %1200 = vmatprep.subr.mxu0 0.0
  %1201 = vmatpush1.msra.mxu0 0.0
  %1202 = vmatprep.subr.mxu0 0.0
  %1203 = vmatpush1.msra.mxu0 0.0
  %1204 = vmatprep.subr.mxu0 0.0
  %1205 = vmatpush1.msra.mxu0 0.0
  %1206 = vmatprep.subr.mxu0 0.0
  %1207 = vmatpush1.msra.mxu0 0.0
  %1208 = vmatprep.subr.mxu0 0.0
  %1209 = vmatpush1.msra.mxu0 0.0
  %1210 = vmatprep.subr.mxu0 0.0
  %1211 = vmatpush1.msra.mxu0 0.0
  %1212 = vmatprep.subr.mxu0 0.0
  %1213 = vmatpush1.msra.mxu0 0.0
  %1214 = vmatprep.subr.mxu0 0.0
  %1215 = vmatpush1.msra.mxu0 0.0
  %1216 = vmatprep.mubr.f32.mxu0 0.0
  %1217 = vmatmul.mubr.f32.gmra.mrb[0].mxu0 %v1054
  %v1218 = vpop.f32.mrb[0].mxu0
  %v1219 = vadd.f32 %v1074, %v1218
  %v1220 = vpop.f32.mrb[0].mxu0
  %v1221 = vadd.f32 %v1076, %v1220
  %1222 = vdwg.mxu0
  %v1223 = vxor.u32 %v1148, 2147483648
  %v1224 = vxor.u32 %v1150, 2147483648
  %v1225 = vxor.u32 %v1219, 2147483648
  %v1226 = vmul.f32 %v1223, 1.442695
  %v1227 = vpow.pop %v1226
  %v1228 = vmul.f32 %v1224, 1.442695
  %v1229 = vpow.pop %v1228
  %v1230 = vmul.f32 %v1225, 1.442695
  %v1231 = vpow.pop %v1230
  %v1232 = vadd.f32 %v1227, 1.0
  %v1233 = vadd.f32 %v1229, 1.0
  %v1234 = vadd.f32 %v1231, 1.0
  %v1235 = vrcp.pop %v1232
  %v1236 = vmul.f32 1.0, %v1235
  %v1237 = vrcp.pop %v1233
  %v1238 = vmul.f32 1.0, %v1237
  %v1239 = vrcp.pop %v1234
  %v1240 = vmul.f32 1.0, %v1239
  %v1241 = vtanh.pop %v1221
  %v1242 = vmul.f32 %v1238, %v1052
  %v1243 = vmul.f32 %v1236, %v1241
  %v1244 = vadd.f32 %v1242, %v1243
  %v1245 = vtanh.pop %v1244
  %v1246 = vmul.f32 %v1240, %v1245
  %s1247 = scalar_lea.vmem %s2, 12
  %1248 = vst [vmem:[%s1247] sm:$0x3] %v1246
  // Predicated region
  $region10: #{genlstm_forward.1} parent=0 // pred_check
    _
  $region11: #{genlstm_forward.1} parent=0 // pred_check_branch
    %1250 = sbr.rel (0) target = $region13
  $region12: #{genlstm_forward.1} parent=0 // pred_region
    _
  $region13: #{genlstm_forward.1} parent=0 // pred_fallthru
    _
  // Predicated region
  $region14: #{genlstm_forward.1} parent=0 // pred_check
    _
  $region15: #{genlstm_forward.1} parent=0 // pred_check_branch
    %1252 = sbr.rel (0) target = $region17
  $region16: #{genlstm_forward.1} parent=0 // pred_region
    _
  $region17: #{genlstm_forward.1} parent=0 // pred_fallthru
    _

</llo_original>
